<compile_context>
chip_gen: v7x
topology: tpu7x:2x2x1
jax: 0.10.0
libtpu: 0.0.40
codegen_flags: <defaults>
</compile_context>

<pallas_src>
import jax
import jax.numpy as jnp
from jax import lax
from jax.experimental import pallas as pl
from jax.experimental.pallas import tpu as pltpu

LEAKY_SLOPE = 0.01  # PyTorch nn.LeakyReLU default


def _round_up(x, m):
    return ((x + m - 1) // m) * m


def _pick_tile(n_pad, pref):
    """Largest tile <= pref (and <= n_pad), multiple of 128, dividing n_pad.

    n_pad is always a multiple of 128 and pref is a power-of-two multiple of
    128, so halving always terminates at a valid divisor (128)."""
    t = min(pref, n_pad)
    while t > 128 and n_pad % t != 0:
        t //= 2
    return t


def _enc_row_pref(input_dim):
    """Row-tile preference targeting a ~4 MiB f32 input block (8 MiB dbl-buffered)."""
    for rows in (1024, 512, 256, 128):
        if rows * 4 * input_dim <= 4 * 1024 * 1024:
            return rows
    return 128


# --------------------------- Pass A: encoder ---------------------------

def _encoder_kernel(v_ref, w1_ref, b1_ref, w2_ref, b2_ref, w3_ref, b3_ref,
                    e_ref, hn_ref):
    """One row-tile of the 3-layer MLP encoder + half squared norm.

    bf16 MXU operands (cast in-kernel), f32 accumulate, bias/LeakyReLU in f32.
    """
    v = v_ref[...].astype(jnp.bfloat16)                            # in-kernel cast
    h = jnp.dot(v, w1_ref[...], preferred_element_type=jnp.float32) + b1_ref[...]
    h = jnp.maximum(h, LEAKY_SLOPE * h)                            # LeakyReLU (f32)
    h = jnp.dot(h.astype(jnp.bfloat16), w2_ref[...],
                preferred_element_type=jnp.float32) + b2_ref[...]
    h = jnp.maximum(h, LEAKY_SLOPE * h)                            # LeakyReLU (f32)
    e = jnp.dot(h.astype(jnp.bfloat16), w3_ref[...],
                preferred_element_type=jnp.float32) + b3_ref[...]
    e_ref[...] = e
    hn_ref[...] = 0.5 * jnp.sum(e * e, axis=1, keepdims=True)      # (tm, 1)


def _encode(params, V, tm):
    """Encode rows of V (f32, shape (n_pad, input_dim)).

    Returns (e, hn): e is (n_pad, z_dim) f32 embeddings, hn is (n_pad, 1) f32
    half squared norms 0.5*||e||^2.
    """
    n_pad, input_dim = V.shape
    hidden = params.w1.shape[1]
    z_dim = params.w3.shape[1]

    flops = 2 * n_pad * (input_dim * hidden + hidden * hidden + hidden * z_dim)
    bytes_acc = (4 * n_pad * input_dim
                 + 2 * (params.w1.size + params.w2.size + params.w3.size)
                 + 4 * (2 * hidden + z_dim)
                 + 4 * n_pad * (z_dim + 1))

    def full(a):
        return pl.BlockSpec(a.shape, lambda i: (0,) * a.ndim)

    return pl.pallas_call(
        _encoder_kernel,
        out_shape=(jax.ShapeDtypeStruct((n_pad, z_dim), jnp.float32),
                   jax.ShapeDtypeStruct((n_pad, 1), jnp.float32)),
        grid=(n_pad // tm,),
        in_specs=[
            pl.BlockSpec((tm, input_dim), lambda i: (i, 0)),
            full(params.w1), full(params.b1),
            full(params.w2), full(params.b2),
            full(params.w3), full(params.b3),
        ],
        out_specs=[
            pl.BlockSpec((tm, z_dim), lambda i: (i, 0)),
            pl.BlockSpec((tm, 1), lambda i: (i, 0)),
        ],
        compiler_params=pltpu.CompilerParams(
            dimension_semantics=("parallel",),
            vmem_limit_bytes=32 * 1024 * 1024),
        cost_estimate=pl.CostEstimate(
            flops=int(flops), transcendentals=0, bytes_accessed=int(bytes_acc)),
    )(V, params.w1, params.b1, params.w2, params.b2, params.w3, params.b3)


# --------------------------- Pass B: RBF gram ---------------------------

def _gram_kernel(ex_ref, hx_ref, ez_ref, hz_ref, k_ref):
    # NT-form contraction over last dims: no materialized transpose of ez.
    xz = lax.dot_general(ex_ref[...], ez_ref[...], (((1,), (1,)), ((), ())),
                         preferred_element_type=jnp.float32)       # (tm, tn)
    # exp(-0.5*clamp(r2, 0)) == min(exp(xz - 0.5||x||^2 - 0.5||z||^2), 1)
    # hx: (tm, 1), hz: (1, tn) -> pure broadcast arithmetic, no per-tile
    # reductions or transposes.
    k = jnp.minimum(jnp.exp(xz - hx_ref[...] - hz_ref[...]), 1.0)
    k_ref[...] = k.astype(k_ref.dtype)


def _gram(ex, hx, ez, hz_row, tm, tn, out_dtype=jnp.float32):
    nx_pad, z_dim = ex.shape
    nz_pad = ez.shape[0]

    flops = 2 * nx_pad * nz_pad * z_dim + 3 * nx_pad * nz_pad
    bytes_acc = (4 * ex.size * (nz_pad // tn)
                 + 4 * ez.size * (nx_pad // tm)
                 + jnp.dtype(out_dtype).itemsize * nx_pad * nz_pad)

    return pl.pallas_call(
        _gram_kernel,
        out_shape=jax.ShapeDtypeStruct((nx_pad, nz_pad), out_dtype),
        grid=(nx_pad // tm, nz_pad // tn),
        in_specs=[
            pl.BlockSpec((tm, z_dim), lambda i, j: (i, 0)),
            pl.BlockSpec((tm, 1), lambda i, j: (i, 0)),
            pl.BlockSpec((tn, z_dim), lambda i, j: (j, 0)),
            pl.BlockSpec((1, tn), lambda i, j: (0, j)),
        ],
        out_specs=pl.BlockSpec((tm, tn), lambda i, j: (i, j)),
        compiler_params=pltpu.CompilerParams(
            dimension_semantics=("parallel", "parallel"),
            vmem_limit_bytes=32 * 1024 * 1024),
        cost_estimate=pl.CostEstimate(
            flops=int(flops), transcendentals=int(nx_pad * nz_pad),
            bytes_accessed=int(bytes_acc)),
    )(ex, hx, ez, hz_row)


# --------------------------- parameters & wrapper ---------------------------

class DeepRBFKernelParams:
    """Deterministic parameter container matching PyTorch Encoder shapes."""

    def __init__(self, input_dim, z_dim, hidden_dim, key):
        k = jax.random.split(key, 6)

        def linear_init(kw, kb, fan_in, fan_out):
            # torch.nn.Linear default init: U(-1/sqrt(fan_in), 1/sqrt(fan_in))
            bound = 1.0 / jnp.sqrt(jnp.float32(fan_in))
            w = jax.random.uniform(kw, (fan_in, fan_out), jnp.float32, -bound, bound)
            b = jax.random.uniform(kb, (1, fan_out), jnp.float32, -bound, bound)
            return w, b

        w1, self.b1 = linear_init(k[0], k[1], input_dim, hidden_dim)
        w2, self.b2 = linear_init(k[2], k[3], hidden_dim, hidden_dim)
        w3, self.b3 = linear_init(k[4], k[5], hidden_dim, z_dim)
        # f32 masters (reference) + bf16 copies (MXU operands in the kernel).
        self.w1_f32, self.w2_f32, self.w3_f32 = w1, w2, w3
        self.w1 = w1.astype(jnp.bfloat16)
        self.w2 = w2.astype(jnp.bfloat16)
        self.w3 = w3.astype(jnp.bfloat16)


def _prep(V):
    """Flatten to (n, input_dim) f32 and pad rows to a multiple of 128."""
    V = V.reshape(V.shape[0], -1).astype(jnp.float32)
    n = V.shape[0]
    n_pad = _round_up(n, 128)
    if n_pad != n:
        V = jnp.pad(V, ((0, n_pad - n), (0, 0)))
    return V, n, n_pad


def deep_rbf_forward(params, X, Z=None, out_dtype=jnp.float32):
    """X, Z: any shape with leading batch dim; flattened to (N, input_dim).

    out_dtype=jnp.bfloat16 halves the K write traffic (values lie in [0, 1]);
    default f32 preserves the PyTorch module's precision.
    """
    Xp, nx, nx_pad = _prep(X)
    tm_enc = _pick_tile(nx_pad, _enc_row_pref(Xp.shape[1]))
    ex, hx = _encode(params, Xp, tm_enc)                      # (nx_pad, z), (nx_pad, 1)

    if Z is None:
        # Reuse the X embedding: encoder runs only once for the self-kernel case.
        ez, hz, nz, nz_pad = ex, hx, nx, nx_pad
    else:
        Zp, nz, nz_pad = _prep(Z)
        assert Xp.shape[1] == Zp.shape[1]
        tn_enc = _pick_tile(nz_pad, _enc_row_pref(Zp.shape[1]))
        ez, hz = _encode(params, Zp, tn_enc)

    # Lane-major Z-side half-norms: a negligible (4*nz_pad byte) relayout that
    # removes all per-tile transposes/reductions from the gram epilogue.
    hz_row = hz.reshape(1, nz_pad)

    tm = _pick_tile(nx_pad, 1024)
    tn = _pick_tile(nz_pad, 2048)                             # lane-dense column tile
    K = _gram(ex, hx, ez, hz_row, tm, tn, out_dtype=out_dtype)
    if nx_pad != nx or nz_pad != nz:
        K = K[:nx, :nz]
    return K


# --------------------------- reference & test ---------------------------

def _reference(params, X, Z=None):
    """Pure-JAX f32 reference mirroring the PyTorch forward."""
    X = X.reshape(X.shape[0], -1).astype(jnp.float32)
    Z = X if Z is None else Z.reshape(Z.shape[0], -1).astype(jnp.float32)

    def enc(v):
        h = v @ params.w1_f32 + params.b1
        h = jnp.where(h > 0, h, LEAKY_SLOPE * h)
        h = h @ params.w2_f32 + params.b2
        h = jnp.where(h > 0, h, LEAKY_SLOPE * h)
        return h @ params.w3_f32 + params.b3

    ex, ez = enc(X), enc(Z)
    x2 = jnp.sum(ex ** 2, axis=1, keepdims=True)
    z2 = jnp.sum(ez ** 2, axis=1, keepdims=True)
    r2 = jnp.maximum(x2 - 2.0 * (ex @ ez.T) + z2.T, 0.0)      # clamp(min=0)
    return jnp.exp(-0.5 * r2)


if __name__ == "__main__":
    # X is a batch of 2 NCHW images (2, 4, 16, 16) -> input_dim = 1024
    batch, C, H, W = 2, 4, 16, 16
    input_dim = C * H * W
    hidden_dim = 32
    z_dim = 8

    key = jax.random.PRNGKey(0)
    k_param, k_x = jax.random.split(key)
    params = DeepRBFKernelParams(input_dim, z_dim, hidden_dim, k_param)
    X = jax.random.normal(k_x, (batch, C, H, W), jnp.float32)

    K = deep_rbf_forward(params, X)          # Z defaults to X
    K = jax.block_until_ready(K)

    K_ref = _reference(params, X)
    assert K.shape == (batch, batch)
    # bf16 MXU operands (f32 accumulate) -> loosened tolerance vs f32 reference.
    assert jnp.allclose(K, K_ref, atol=2e-2, rtol=2e-2), "mismatch vs reference"

    print("KERNEL_OK")
</pallas_src>

<mosaic_0001>
module attributes {stable_mosaic.version = 11 : i64} {
  func.func @_encoder_kernel(%arg0: i32, %arg1: memref<128x1024xf32, #tpu.memory_space<vmem>>, %arg2: memref<1024x32xbf16, #tpu.memory_space<vmem>>, %arg3: memref<1x32xf32, #tpu.memory_space<vmem>>, %arg4: memref<32x32xbf16, #tpu.memory_space<vmem>>, %arg5: memref<1x32xf32, #tpu.memory_space<vmem>>, %arg6: memref<32x8xbf16, #tpu.memory_space<vmem>>, %arg7: memref<1x8xf32, #tpu.memory_space<vmem>>, %arg8: memref<128x8xf32, #tpu.memory_space<vmem>>, %arg9: memref<128x1xf32, #tpu.memory_space<vmem>>) attributes {dimension_semantics = [#tpu.dimension_semantics<parallel>], iteration_bounds = array<i64: 1>, scalar_prefetch = 0 : i64, scratch_operands = 0 : i64, tpu.core_type = #tpu.core_type<tc>, window_params = [{transform_indices = @transform_0, window_bounds = array<i64: 128, 1024>}, {pipeline_mode = #tpu.pipeline_mode<synchronous>, transform_indices = @transform_1, window_bounds = array<i64: 1024, 32>}, {pipeline_mode = #tpu.pipeline_mode<synchronous>, transform_indices = @transform_2, window_bounds = array<i64: 1, 32>}, {pipeline_mode = #tpu.pipeline_mode<synchronous>, transform_indices = @transform_3, window_bounds = array<i64: 32, 32>}, {pipeline_mode = #tpu.pipeline_mode<synchronous>, transform_indices = @transform_4, window_bounds = array<i64: 1, 32>}, {pipeline_mode = #tpu.pipeline_mode<synchronous>, transform_indices = @transform_5, window_bounds = array<i64: 32, 8>}, {pipeline_mode = #tpu.pipeline_mode<synchronous>, transform_indices = @transform_6, window_bounds = array<i64: 1, 8>}, {transform_indices = @transform_7, window_bounds = array<i64: 128, 8>}, {transform_indices = @transform_8, window_bounds = array<i64: 128, 1>}]} {
    %c0 = arith.constant 0 : index
    %c0_0 = arith.constant 0 : index
    %0 = vector.load %arg1[%c0, %c0_0] : memref<128x1024xf32, #tpu.memory_space<vmem>>, vector<128x1024xf32>
    %1 = arith.truncf %0 : vector<128x1024xf32> to vector<128x1024xbf16>
    %c0_1 = arith.constant 0 : index
    %c0_2 = arith.constant 0 : index
    %2 = vector.load %arg2[%c0_1, %c0_2] : memref<1024x32xbf16, #tpu.memory_space<vmem>>, vector<1024x32xbf16>
    %cst = arith.constant dense<0.000000e+00> : vector<128x32xf32>
    %3 = tpu.matmul %1, %2, %cst {dimension_numbers = #tpu.dot_dimension_numbers<[1], [0], [0], [1], [0, 0, 1, 1], [], []>} : vector<128x1024xbf16>, vector<1024x32xbf16>, vector<128x32xf32> -> vector<128x32xf32>
    %c0_3 = arith.constant 0 : index
    %c0_4 = arith.constant 0 : index
    %4 = vector.load %arg3[%c0_3, %c0_4] : memref<1x32xf32, #tpu.memory_space<vmem>>, vector<1x32xf32>
    %5 = vector.broadcast %4 : vector<1x32xf32> to vector<128x32xf32>
    %6 = arith.addf %3, %5 : vector<128x32xf32>
    %cst_5 = arith.constant 0.00999999977 : f32
    %7 = vector.broadcast %cst_5 : f32 to vector<128x32xf32>
    %8 = arith.mulf %7, %6 : vector<128x32xf32>
    %9 = arith.maximumf %6, %8 : vector<128x32xf32>
    %10 = arith.truncf %9 : vector<128x32xf32> to vector<128x32xbf16>
    %c0_6 = arith.constant 0 : index
    %c0_7 = arith.constant 0 : index
    %11 = vector.load %arg4[%c0_6, %c0_7] : memref<32x32xbf16, #tpu.memory_space<vmem>>, vector<32x32xbf16>
    %cst_8 = arith.constant dense<0.000000e+00> : vector<128x32xf32>
    %12 = tpu.matmul %10, %11, %cst_8 {dimension_numbers = #tpu.dot_dimension_numbers<[1], [0], [0], [1], [0, 0, 1, 1], [], []>} : vector<128x32xbf16>, vector<32x32xbf16>, vector<128x32xf32> -> vector<128x32xf32>
    %c0_9 = arith.constant 0 : index
    %c0_10 = arith.constant 0 : index
    %13 = vector.load %arg5[%c0_9, %c0_10] : memref<1x32xf32, #tpu.memory_space<vmem>>, vector<1x32xf32>
    %14 = vector.broadcast %13 : vector<1x32xf32> to vector<128x32xf32>
    %15 = arith.addf %12, %14 : vector<128x32xf32>
    %cst_11 = arith.constant 0.00999999977 : f32
    %16 = vector.broadcast %cst_11 : f32 to vector<128x32xf32>
    %17 = arith.mulf %16, %15 : vector<128x32xf32>
    %18 = arith.maximumf %15, %17 : vector<128x32xf32>
    %19 = arith.truncf %18 : vector<128x32xf32> to vector<128x32xbf16>
    %c0_12 = arith.constant 0 : index
    %c0_13 = arith.constant 0 : index
    %20 = vector.load %arg6[%c0_12, %c0_13] : memref<32x8xbf16, #tpu.memory_space<vmem>>, vector<32x8xbf16>
    %cst_14 = arith.constant dense<0.000000e+00> : vector<128x8xf32>
    %21 = tpu.matmul %19, %20, %cst_14 {dimension_numbers = #tpu.dot_dimension_numbers<[1], [0], [0], [1], [0, 0, 1, 1], [], []>} : vector<128x32xbf16>, vector<32x8xbf16>, vector<128x8xf32> -> vector<128x8xf32>
    %c0_15 = arith.constant 0 : index
    %c0_16 = arith.constant 0 : index
    %22 = vector.load %arg7[%c0_15, %c0_16] : memref<1x8xf32, #tpu.memory_space<vmem>>, vector<1x8xf32>
    %23 = vector.broadcast %22 : vector<1x8xf32> to vector<128x8xf32>
    %24 = arith.addf %21, %23 : vector<128x8xf32>
    %c0_17 = arith.constant 0 : index
    %c0_18 = arith.constant 0 : index
    %25 = vector.load %arg8[%c0_17, %c0_18] : memref<128x8xf32, #tpu.memory_space<vmem>>, vector<128x8xf32>
    tpu.vector_store %arg8[%c0_17, %c0_18], %24 {strides = array<i32>} : memref<128x8xf32, #tpu.memory_space<vmem>>, vector<128x8xf32>,
    %26 = arith.mulf %24, %24 : vector<128x8xf32>
    %cst_19 = arith.constant dense<0.000000e+00> : vector<128xf32>
    %27 = vector.multi_reduction <add>, %26, %cst_19 [1] : vector<128x8xf32> to vector<128xf32>
    %28 = vector.shape_cast %27 : vector<128xf32> to vector<128x1xf32>
    %cst_20 = arith.constant 5.000000e-01 : f32
    %29 = vector.broadcast %cst_20 : f32 to vector<128x1xf32>
    %30 = arith.mulf %29, %28 : vector<128x1xf32>
    %c0_21 = arith.constant 0 : index
    %c0_22 = arith.constant 0 : index
    %31 = vector.load %arg9[%c0_21, %c0_22] : memref<128x1xf32, #tpu.memory_space<vmem>>, vector<128x1xf32>
    tpu.vector_store %arg9[%c0_21, %c0_22], %30 {strides = array<i32>} : memref<128x1xf32, #tpu.memory_space<vmem>>, vector<128x1xf32>,
    return
  }
  func.func @transform_0(%arg0: i32) -> (i32, i32) {
    %c0_i32 = arith.constant 0 : i32
    %c0_i32_0 = arith.constant 0 : i32
    return %arg0, %c0_i32 : i32, i32
  }
  func.func @transform_1(%arg0: i32) -> (i32, i32) {
    %c0_i32 = arith.constant 0 : i32
    %c0_i32_0 = arith.constant 0 : i32
    %c0_i32_1 = arith.constant 0 : i32
    return %c0_i32, %c0_i32_0 : i32, i32
  }
  func.func @transform_2(%arg0: i32) -> (i32, i32) {
    %c0_i32 = arith.constant 0 : i32
    %c0_i32_0 = arith.constant 0 : i32
    %c0_i32_1 = arith.constant 0 : i32
    return %c0_i32, %c0_i32_0 : i32, i32
  }
  func.func @transform_3(%arg0: i32) -> (i32, i32) {
    %c0_i32 = arith.constant 0 : i32
    %c0_i32_0 = arith.constant 0 : i32
    %c0_i32_1 = arith.constant 0 : i32
    return %c0_i32, %c0_i32_0 : i32, i32
  }
  func.func @transform_4(%arg0: i32) -> (i32, i32) {
    %c0_i32 = arith.constant 0 : i32
    %c0_i32_0 = arith.constant 0 : i32
    %c0_i32_1 = arith.constant 0 : i32
    return %c0_i32, %c0_i32_0 : i32, i32
  }
  func.func @transform_5(%arg0: i32) -> (i32, i32) {
    %c0_i32 = arith.constant 0 : i32
    %c0_i32_0 = arith.constant 0 : i32
    %c0_i32_1 = arith.constant 0 : i32
    return %c0_i32, %c0_i32_0 : i32, i32
  }
  func.func @transform_6(%arg0: i32) -> (i32, i32) {
    %c0_i32 = arith.constant 0 : i32
    %c0_i32_0 = arith.constant 0 : i32
    %c0_i32_1 = arith.constant 0 : i32
    return %c0_i32, %c0_i32_0 : i32, i32
  }
  func.func @transform_7(%arg0: i32) -> (i32, i32) {
    %c0_i32 = arith.constant 0 : i32
    %c0_i32_0 = arith.constant 0 : i32
    return %arg0, %c0_i32 : i32, i32
  }
  func.func @transform_8(%arg0: i32) -> (i32, i32) {
    %c0_i32 = arith.constant 0 : i32
    %c0_i32_0 = arith.constant 0 : i32
    return %arg0, %c0_i32 : i32, i32
  }
}

</mosaic_0001>

<llo_original>
// kernel: tpu_custom_call.1
$region0: #{tpu_custom_call.1}
  #allocation0 [shape = 'u32[]', space=smem, size = 0x4, offset = 0x4, fixed_abs, tag = 'smem constant byte address 0x4 - core index']
  #allocation1 [shape = 'u32[144,128]{1,0:T(1,128)}', space=vmem, size = 0x12000, scoped, tag = 'internal scratch']
  %s0 = inlined_call_operand.hbm [shape: f32[128,1024], index: 0, kind: input, shape index: {}]
  %s1 = inlined_call_operand.vmem [shape: bf16[1024,32], index: 1, kind: input, shape index: {}]
  %s2 = inlined_call_operand.vmem [shape: f32[1,32], index: 2, kind: input, shape index: {}]
  %s3 = inlined_call_operand.vmem [shape: bf16[32,32], index: 3, kind: input, shape index: {}]
  %s4 = inlined_call_operand.vmem [shape: f32[1,32], index: 4, kind: input, shape index: {}]
  %s5 = inlined_call_operand.vmem [shape: bf16[32,8], index: 5, kind: input, shape index: {}]
  %s6 = inlined_call_operand.vmem [shape: f32[1,8], index: 6, kind: input, shape index: {}]
  %s7 = inlined_call_operand.vmem [shape: f32[128,8], index: 7, kind: output, shape index: {0}]
  %s8 = inlined_call_operand.vmem [shape: f32[128,1], index: 8, kind: output, shape index: {1}]
  %9 = xla_tuple %s7, %s8
  %s10 = sld [smem:[#allocation0]]
  $region50: #{tpu_custom_call.1} parent=0
    _
  %s12 = ssub.s32 1, %s10
  %s13 = scalar_select 0, %s12, %s10
  $region1: #{tpu_custom_call.1} parent=0
    #allocation2 [shape = 'u8[524288]{0}', space=vmem, size = 0x80000, scoped, tag = 'input window, operand 0, single buffered']
    #allocation3 [shape = 's32[1]{0}', space=sflag, size = 0x4, scoped, tag = 'scoped memory for tpu_custom_call.1']
    %14 = vsyncpa [#allocation3], 0
    // Predicated region
    $region2: #{tpu_custom_call.1} parent=1 // pred_check
      _
    $region3: #{tpu_custom_call.1} parent=1 // pred_check_branch
      %16 = sbr.rel (0) target = $region5
    $region4: #{tpu_custom_call.1} parent=1 // pred_region
      %s18 = ssub.s32 16384, 16384
      %19 = vsyncadd [#allocation3], %s18
      %s20 = sshll.u32 [#allocation2], 4
      %s21 = int_to_ptr.vmem [resolvable:$true] %s20
      %26 = dma.hbm_to_vmem [thread:$0]  %s0, 16384, %s21, [#allocation3], 1024, 1024, 64
    $region5: #{tpu_custom_call.1} parent=1 // pred_fallthru
      _
    // Predicated region
    $region6: #{tpu_custom_call.1} parent=1 // pred_check
      _
    $region7: #{tpu_custom_call.1} parent=1 // pred_check_branch
      %28 = sbr.rel (0) target = $region9
    $region8: #{tpu_custom_call.1} parent=1 // pred_region
      _
    $region9: #{tpu_custom_call.1} parent=1 // pred_fallthru
      _
    // Predicated region
    $region10: #{tpu_custom_call.1} parent=1 // pred_check
      _
    $region11: #{tpu_custom_call.1} parent=1 // pred_check_branch
      %30 = sbr.rel (0) target = $region13
    $region12: #{tpu_custom_call.1} parent=1 // pred_region
      _
    $region13: #{tpu_custom_call.1} parent=1 // pred_fallthru
      _
    // Predicated region
    $region14: #{tpu_custom_call.1} parent=1 // pred_check
      _
    $region15: #{tpu_custom_call.1} parent=1 // pred_check_branch
      %32 = sbr.rel (0) target = $region17
    $region16: #{tpu_custom_call.1} parent=1 // pred_region
      _
    $region17: #{tpu_custom_call.1} parent=1 // pred_fallthru
      _
    // Predicated region
    $region18: #{tpu_custom_call.1} parent=1 // pred_check
      _
    $region19: #{tpu_custom_call.1} parent=1 // pred_check_branch
      %34 = sbr.rel (0) target = $region21
    $region20: #{tpu_custom_call.1} parent=1 // pred_region
      _
    $region21: #{tpu_custom_call.1} parent=1 // pred_fallthru
      _
    // Predicated region
    $region22: #{tpu_custom_call.1} parent=1 // pred_check
      _
    $region23: #{tpu_custom_call.1} parent=1 // pred_check_branch
      %36 = sbr.rel (0) target = $region25
    $region24: #{tpu_custom_call.1} parent=1 // pred_region
      _
    $region25: #{tpu_custom_call.1} parent=1 // pred_fallthru
      _
    // Predicated region
    $region26: #{tpu_custom_call.1} parent=1 // pred_check
      _
    $region27: #{tpu_custom_call.1} parent=1 // pred_check_branch
      %38 = sbr.rel (0) target = $region29
    $region28: #{tpu_custom_call.1} parent=1 // pred_region
      _
    $region29: #{tpu_custom_call.1} parent=1 // pred_fallthru
      _
    // Predicated region
    $region30: #{tpu_custom_call.1} parent=1 // pred_check
      _
    $region31: #{tpu_custom_call.1} parent=1 // pred_check_branch
      %40 = sbr.rel (0) target = $region33
    $region32: #{tpu_custom_call.1} parent=1 // pred_region
      %41 = dma.done [#allocation3], 16384
    $region33: #{tpu_custom_call.1} parent=1 // pred_fallthru
      _
    %v43 = vld [vmem:[#allocation2] sm:$0xff]
    %v44 = vld [vmem:[#allocation2 + $0x8] sm:$0xff]
    %v45 = vld [vmem:[#allocation2 + $0x10] sm:$0xff]
    %v46 = vld [vmem:[#allocation2 + $0x18] sm:$0xff]
    %v47 = vld [vmem:[#allocation2 + $0x20] sm:$0xff]
    %v48 = vld [vmem:[#allocation2 + $0x28] sm:$0xff]
    %v49 = vld [vmem:[#allocation2 + $0x30] sm:$0xff]
    %v50 = vld [vmem:[#allocation2 + $0x38] sm:$0xff]
    %v51 = vld [vmem:[#allocation2 + $0x40] sm:$0xff]
    %v52 = vld [vmem:[#allocation2 + $0x48] sm:$0xff]
    %v53 = vld [vmem:[#allocation2 + $0x50] sm:$0xff]
    %v54 = vld [vmem:[#allocation2 + $0x58] sm:$0xff]
    %v55 = vld [vmem:[#allocation2 + $0x60] sm:$0xff]
    %v56 = vld [vmem:[#allocation2 + $0x68] sm:$0xff]
    %v57 = vld [vmem:[#allocation2 + $0x70] sm:$0xff]
    %v58 = vld [vmem:[#allocation2 + $0x78] sm:$0xff]
    %v59 = vld [vmem:[#allocation2 + $0x80] sm:$0xff]
    %v60 = vld [vmem:[#allocation2 + $0x88] sm:$0xff]
    %v61 = vld [vmem:[#allocation2 + $0x90] sm:$0xff]
    %v62 = vld [vmem:[#allocation2 + $0x98] sm:$0xff]
    %v63 = vld [vmem:[#allocation2 + $0xa0] sm:$0xff]
    %v64 = vld [vmem:[#allocation2 + $0xa8] sm:$0xff]
    %v65 = vld [vmem:[#allocation2 + $0xb0] sm:$0xff]
    %v66 = vld [vmem:[#allocation2 + $0xb8] sm:$0xff]
    %v67 = vld [vmem:[#allocation2 + $0xc0] sm:$0xff]
    %v68 = vld [vmem:[#allocation2 + $0xc8] sm:$0xff]
    %v69 = vld [vmem:[#allocation2 + $0xd0] sm:$0xff]
    %v70 = vld [vmem:[#allocation2 + $0xd8] sm:$0xff]
    %v71 = vld [vmem:[#allocation2 + $0xe0] sm:$0xff]
    %v72 = vld [vmem:[#allocation2 + $0xe8] sm:$0xff]
    %v73 = vld [vmem:[#allocation2 + $0xf0] sm:$0xff]
    %v74 = vld [vmem:[#allocation2 + $0xf8] sm:$0xff]
    %v75 = vld [vmem:[#allocation2 + $0x100] sm:$0xff]
    %v76 = vld [vmem:[#allocation2 + $0x108] sm:$0xff]
    %v77 = vld [vmem:[#allocation2 + $0x110] sm:$0xff]
    %v78 = vld [vmem:[#allocation2 + $0x118] sm:$0xff]
    %v79 = vld [vmem:[#allocation2 + $0x120] sm:$0xff]
    %v80 = vld [vmem:[#allocation2 + $0x128] sm:$0xff]
    %v81 = vld [vmem:[#allocation2 + $0x130] sm:$0xff]
    %v82 = vld [vmem:[#allocation2 + $0x138] sm:$0xff]
    %v83 = vld [vmem:[#allocation2 + $0x140] sm:$0xff]
    %v84 = vld [vmem:[#allocation2 + $0x148] sm:$0xff]
    %v85 = vld [vmem:[#allocation2 + $0x150] sm:$0xff]
    %v86 = vld [vmem:[#allocation2 + $0x158] sm:$0xff]
    %v87 = vld [vmem:[#allocation2 + $0x160] sm:$0xff]
    %v88 = vld [vmem:[#allocation2 + $0x168] sm:$0xff]
    %v89 = vld [vmem:[#allocation2 + $0x170] sm:$0xff]
    %v90 = vld [vmem:[#allocation2 + $0x178] sm:$0xff]
    %v91 = vld [vmem:[#allocation2 + $0x180] sm:$0xff]
    %v92 = vld [vmem:[#allocation2 + $0x188] sm:$0xff]
    %v93 = vld [vmem:[#allocation2 + $0x190] sm:$0xff]
    %v94 = vld [vmem:[#allocation2 + $0x198] sm:$0xff]
    %v95 = vld [vmem:[#allocation2 + $0x1a0] sm:$0xff]
    %v96 = vld [vmem:[#allocation2 + $0x1a8] sm:$0xff]
    %v97 = vld [vmem:[#allocation2 + $0x1b0] sm:$0xff]
    %v98 = vld [vmem:[#allocation2 + $0x1b8] sm:$0xff]
    %v99 = vld [vmem:[#allocation2 + $0x1c0] sm:$0xff]
    %v100 = vld [vmem:[#allocation2 + $0x1c8] sm:$0xff]
    %v101 = vld [vmem:[#allocation2 + $0x1d0] sm:$0xff]
    %v102 = vld [vmem:[#allocation2 + $0x1d8] sm:$0xff]
    %v103 = vld [vmem:[#allocation2 + $0x1e0] sm:$0xff]
    %v104 = vld [vmem:[#allocation2 + $0x1e8] sm:$0xff]
    %v105 = vld [vmem:[#allocation2 + $0x1f0] sm:$0xff]
    %v106 = vld [vmem:[#allocation2 + $0x1f8] sm:$0xff]
    %v107 = vld [vmem:[#allocation2 + $0x200] sm:$0xff]
    %v108 = vld [vmem:[#allocation2 + $0x208] sm:$0xff]
    %v109 = vld [vmem:[#allocation2 + $0x210] sm:$0xff]
    %v110 = vld [vmem:[#allocation2 + $0x218] sm:$0xff]
    %v111 = vld [vmem:[#allocation2 + $0x220] sm:$0xff]
    %v112 = vld [vmem:[#allocation2 + $0x228] sm:$0xff]
    %v113 = vld [vmem:[#allocation2 + $0x230] sm:$0xff]
    %v114 = vld [vmem:[#allocation2 + $0x238] sm:$0xff]
    %v115 = vld [vmem:[#allocation2 + $0x240] sm:$0xff]
    %v116 = vld [vmem:[#allocation2 + $0x248] sm:$0xff]
    %v117 = vld [vmem:[#allocation2 + $0x250] sm:$0xff]
    %v118 = vld [vmem:[#allocation2 + $0x258] sm:$0xff]
    %v119 = vld [vmem:[#allocation2 + $0x260] sm:$0xff]
    %v120 = vld [vmem:[#allocation2 + $0x268] sm:$0xff]
    %v121 = vld [vmem:[#allocation2 + $0x270] sm:$0xff]
    %v122 = vld [vmem:[#allocation2 + $0x278] sm:$0xff]
    %v123 = vld [vmem:[#allocation2 + $0x280] sm:$0xff]
    %v124 = vld [vmem:[#allocation2 + $0x288] sm:$0xff]
    %v125 = vld [vmem:[#allocation2 + $0x290] sm:$0xff]
    %v126 = vld [vmem:[#allocation2 + $0x298] sm:$0xff]
    %v127 = vld [vmem:[#allocation2 + $0x2a0] sm:$0xff]
    %v128 = vld [vmem:[#allocation2 + $0x2a8] sm:$0xff]
    %v129 = vld [vmem:[#allocation2 + $0x2b0] sm:$0xff]
    %v130 = vld [vmem:[#allocation2 + $0x2b8] sm:$0xff]
    %v131 = vld [vmem:[#allocation2 + $0x2c0] sm:$0xff]
    %v132 = vld [vmem:[#allocation2 + $0x2c8] sm:$0xff]
    %v133 = vld [vmem:[#allocation2 + $0x2d0] sm:$0xff]
    %v134 = vld [vmem:[#allocation2 + $0x2d8] sm:$0xff]
    %v135 = vld [vmem:[#allocation2 + $0x2e0] sm:$0xff]
    %v136 = vld [vmem:[#allocation2 + $0x2e8] sm:$0xff]
    %v137 = vld [vmem:[#allocation2 + $0x2f0] sm:$0xff]
    %v138 = vld [vmem:[#allocation2 + $0x2f8] sm:$0xff]
    %v139 = vld [vmem:[#allocation2 + $0x300] sm:$0xff]
    %v140 = vld [vmem:[#allocation2 + $0x308] sm:$0xff]
    %v141 = vld [vmem:[#allocation2 + $0x310] sm:$0xff]
    %v142 = vld [vmem:[#allocation2 + $0x318] sm:$0xff]
    %v143 = vld [vmem:[#allocation2 + $0x320] sm:$0xff]
    %v144 = vld [vmem:[#allocation2 + $0x328] sm:$0xff]
    %v145 = vld [vmem:[#allocation2 + $0x330] sm:$0xff]
    %v146 = vld [vmem:[#allocation2 + $0x338] sm:$0xff]
    %v147 = vld [vmem:[#allocation2 + $0x340] sm:$0xff]
    %v148 = vld [vmem:[#allocation2 + $0x348] sm:$0xff]
    %v149 = vld [vmem:[#allocation2 + $0x350] sm:$0xff]
    %v150 = vld [vmem:[#allocation2 + $0x358] sm:$0xff]
    %v151 = vld [vmem:[#allocation2 + $0x360] sm:$0xff]
    %v152 = vld [vmem:[#allocation2 + $0x368] sm:$0xff]
    %v153 = vld [vmem:[#allocation2 + $0x370] sm:$0xff]
    %v154 = vld [vmem:[#allocation2 + $0x378] sm:$0xff]
    %v155 = vld [vmem:[#allocation2 + $0x380] sm:$0xff]
    %v156 = vld [vmem:[#allocation2 + $0x388] sm:$0xff]
    %v157 = vld [vmem:[#allocation2 + $0x390] sm:$0xff]
    %v158 = vld [vmem:[#allocation2 + $0x398] sm:$0xff]
    %v159 = vld [vmem:[#allocation2 + $0x3a0] sm:$0xff]
    %v160 = vld [vmem:[#allocation2 + $0x3a8] sm:$0xff]
    %v161 = vld [vmem:[#allocation2 + $0x3b0] sm:$0xff]
    %v162 = vld [vmem:[#allocation2 + $0x3b8] sm:$0xff]
    %v163 = vld [vmem:[#allocation2 + $0x3c0] sm:$0xff]
    %v164 = vld [vmem:[#allocation2 + $0x3c8] sm:$0xff]
    %v165 = vld [vmem:[#allocation2 + $0x3d0] sm:$0xff]
    %v166 = vld [vmem:[#allocation2 + $0x3d8] sm:$0xff]
    %v167 = vld [vmem:[#allocation2 + $0x3e0] sm:$0xff]
    %v168 = vld [vmem:[#allocation2 + $0x3e8] sm:$0xff]
    %v169 = vld [vmem:[#allocation2 + $0x3f0] sm:$0xff]
    %v170 = vld [vmem:[#allocation2 + $0x3f8] sm:$0xff]
    %v171 = vpack.c.bf16 %v51, %v43
    %v172 = vpack.c.bf16 %v52, %v44
    %v173 = vpack.c.bf16 %v53, %v45
    %v174 = vpack.c.bf16 %v54, %v46
    %v175 = vpack.c.bf16 %v55, %v47
    %v176 = vpack.c.bf16 %v56, %v48
    %v177 = vpack.c.bf16 %v57, %v49
    %v178 = vpack.c.bf16 %v58, %v50
    %v179 = vpack.c.bf16 %v67, %v59
    %v180 = vpack.c.bf16 %v68, %v60
    %v181 = vpack.c.bf16 %v69, %v61
    %v182 = vpack.c.bf16 %v70, %v62
    %v183 = vpack.c.bf16 %v71, %v63
    %v184 = vpack.c.bf16 %v72, %v64
    %v185 = vpack.c.bf16 %v73, %v65
    %v186 = vpack.c.bf16 %v74, %v66
    %v187 = vpack.c.bf16 %v83, %v75
    %v188 = vpack.c.bf16 %v84, %v76
    %v189 = vpack.c.bf16 %v85, %v77
    %v190 = vpack.c.bf16 %v86, %v78
    %v191 = vpack.c.bf16 %v87, %v79
    %v192 = vpack.c.bf16 %v88, %v80
    %v193 = vpack.c.bf16 %v89, %v81
    %v194 = vpack.c.bf16 %v90, %v82
    %v195 = vpack.c.bf16 %v99, %v91
    %v196 = vpack.c.bf16 %v100, %v92
    %v197 = vpack.c.bf16 %v101, %v93
    %v198 = vpack.c.bf16 %v102, %v94
    %v199 = vpack.c.bf16 %v103, %v95
    %v200 = vpack.c.bf16 %v104, %v96
    %v201 = vpack.c.bf16 %v105, %v97
    %v202 = vpack.c.bf16 %v106, %v98
    %v203 = vpack.c.bf16 %v115, %v107
    %v204 = vpack.c.bf16 %v116, %v108
    %v205 = vpack.c.bf16 %v117, %v109
    %v206 = vpack.c.bf16 %v118, %v110
    %v207 = vpack.c.bf16 %v119, %v111
    %v208 = vpack.c.bf16 %v120, %v112
    %v209 = vpack.c.bf16 %v121, %v113
    %v210 = vpack.c.bf16 %v122, %v114
    %v211 = vpack.c.bf16 %v131, %v123
    %v212 = vpack.c.bf16 %v132, %v124
    %v213 = vpack.c.bf16 %v133, %v125
    %v214 = vpack.c.bf16 %v134, %v126
    %v215 = vpack.c.bf16 %v135, %v127
    %v216 = vpack.c.bf16 %v136, %v128
    %v217 = vpack.c.bf16 %v137, %v129
    %v218 = vpack.c.bf16 %v138, %v130
    %v219 = vpack.c.bf16 %v147, %v139
    %v220 = vpack.c.bf16 %v148, %v140
    %v221 = vpack.c.bf16 %v149, %v141
    %v222 = vpack.c.bf16 %v150, %v142
    %v223 = vpack.c.bf16 %v151, %v143
    %v224 = vpack.c.bf16 %v152, %v144
    %v225 = vpack.c.bf16 %v153, %v145
    %v226 = vpack.c.bf16 %v154, %v146
    %v227 = vpack.c.bf16 %v163, %v155
    %v228 = vpack.c.bf16 %v164, %v156
    %v229 = vpack.c.bf16 %v165, %v157
    %v230 = vpack.c.bf16 %v166, %v158
    %v231 = vpack.c.bf16 %v167, %v159
    %v232 = vpack.c.bf16 %v168, %v160
    %v233 = vpack.c.bf16 %v169, %v161
    %v234 = vpack.c.bf16 %v170, %v162
    %v235 = vld [vmem:[%s1] sm:$0xf]
    %v236 = vld [vmem:[%s1 + $0x4] sm:$0xf]
    %v237 = vld [vmem:[%s1 + $0x8] sm:$0xf]
    %v238 = vld [vmem:[%s1 + $0xc] sm:$0xf]
    %v239 = vld [vmem:[%s1 + $0x10] sm:$0xf]
    %v240 = vld [vmem:[%s1 + $0x14] sm:$0xf]
    %v241 = vld [vmem:[%s1 + $0x18] sm:$0xf]
    %v242 = vld [vmem:[%s1 + $0x1c] sm:$0xf]
    %v243 = vld [vmem:[%s1 + $0x20] sm:$0xf]
    %v244 = vld [vmem:[%s1 + $0x24] sm:$0xf]
    %v245 = vld [vmem:[%s1 + $0x28] sm:$0xf]
    %v246 = vld [vmem:[%s1 + $0x2c] sm:$0xf]
    %v247 = vld [vmem:[%s1 + $0x30] sm:$0xf]
    %v248 = vld [vmem:[%s1 + $0x34] sm:$0xf]
    %v249 = vld [vmem:[%s1 + $0x38] sm:$0xf]
    %v250 = vld [vmem:[%s1 + $0x3c] sm:$0xf]
    %v251 = vld [vmem:[%s1 + $0x40] sm:$0xf]
    %v252 = vld [vmem:[%s1 + $0x44] sm:$0xf]
    %v253 = vld [vmem:[%s1 + $0x48] sm:$0xf]
    %v254 = vld [vmem:[%s1 + $0x4c] sm:$0xf]
    %v255 = vld [vmem:[%s1 + $0x50] sm:$0xf]
    %v256 = vld [vmem:[%s1 + $0x54] sm:$0xf]
    %v257 = vld [vmem:[%s1 + $0x58] sm:$0xf]
    %v258 = vld [vmem:[%s1 + $0x5c] sm:$0xf]
    %v259 = vld [vmem:[%s1 + $0x60] sm:$0xf]
    %v260 = vld [vmem:[%s1 + $0x64] sm:$0xf]
    %v261 = vld [vmem:[%s1 + $0x68] sm:$0xf]
    %v262 = vld [vmem:[%s1 + $0x6c] sm:$0xf]
    %v263 = vld [vmem:[%s1 + $0x70] sm:$0xf]
    %v264 = vld [vmem:[%s1 + $0x74] sm:$0xf]
    %v265 = vld [vmem:[%s1 + $0x78] sm:$0xf]
    %v266 = vld [vmem:[%s1 + $0x7c] sm:$0xf]
    %v267 = vld [vmem:[%s1 + $0x80] sm:$0xf]
    %v268 = vld [vmem:[%s1 + $0x84] sm:$0xf]
    %v269 = vld [vmem:[%s1 + $0x88] sm:$0xf]
    %v270 = vld [vmem:[%s1 + $0x8c] sm:$0xf]
    %v271 = vld [vmem:[%s1 + $0x90] sm:$0xf]
    %v272 = vld [vmem:[%s1 + $0x94] sm:$0xf]
    %v273 = vld [vmem:[%s1 + $0x98] sm:$0xf]
    %v274 = vld [vmem:[%s1 + $0x9c] sm:$0xf]
    %v275 = vld [vmem:[%s1 + $0xa0] sm:$0xf]
    %v276 = vld [vmem:[%s1 + $0xa4] sm:$0xf]
    %v277 = vld [vmem:[%s1 + $0xa8] sm:$0xf]
    %v278 = vld [vmem:[%s1 + $0xac] sm:$0xf]
    %v279 = vld [vmem:[%s1 + $0xb0] sm:$0xf]
    %v280 = vld [vmem:[%s1 + $0xb4] sm:$0xf]
    %v281 = vld [vmem:[%s1 + $0xb8] sm:$0xf]
    %v282 = vld [vmem:[%s1 + $0xbc] sm:$0xf]
    %v283 = vld [vmem:[%s1 + $0xc0] sm:$0xf]
    %v284 = vld [vmem:[%s1 + $0xc4] sm:$0xf]
    %v285 = vld [vmem:[%s1 + $0xc8] sm:$0xf]
    %v286 = vld [vmem:[%s1 + $0xcc] sm:$0xf]
    %v287 = vld [vmem:[%s1 + $0xd0] sm:$0xf]
    %v288 = vld [vmem:[%s1 + $0xd4] sm:$0xf]
    %v289 = vld [vmem:[%s1 + $0xd8] sm:$0xf]
    %v290 = vld [vmem:[%s1 + $0xdc] sm:$0xf]
    %v291 = vld [vmem:[%s1 + $0xe0] sm:$0xf]
    %v292 = vld [vmem:[%s1 + $0xe4] sm:$0xf]
    %v293 = vld [vmem:[%s1 + $0xe8] sm:$0xf]
    %v294 = vld [vmem:[%s1 + $0xec] sm:$0xf]
    %v295 = vld [vmem:[%s1 + $0xf0] sm:$0xf]
    %v296 = vld [vmem:[%s1 + $0xf4] sm:$0xf]
    %v297 = vld [vmem:[%s1 + $0xf8] sm:$0xf]
    %v298 = vld [vmem:[%s1 + $0xfc] sm:$0xf]
    %v299 = vld [vmem:[%s1 + $0x100] sm:$0xf]
    %v300 = vld [vmem:[%s1 + $0x104] sm:$0xf]
    %v301 = vld [vmem:[%s1 + $0x108] sm:$0xf]
    %v302 = vld [vmem:[%s1 + $0x10c] sm:$0xf]
    %v303 = vld [vmem:[%s1 + $0x110] sm:$0xf]
    %v304 = vld [vmem:[%s1 + $0x114] sm:$0xf]
    %v305 = vld [vmem:[%s1 + $0x118] sm:$0xf]
    %v306 = vld [vmem:[%s1 + $0x11c] sm:$0xf]
    %v307 = vld [vmem:[%s1 + $0x120] sm:$0xf]
    %v308 = vld [vmem:[%s1 + $0x124] sm:$0xf]
    %v309 = vld [vmem:[%s1 + $0x128] sm:$0xf]
    %v310 = vld [vmem:[%s1 + $0x12c] sm:$0xf]
    %v311 = vld [vmem:[%s1 + $0x130] sm:$0xf]
    %v312 = vld [vmem:[%s1 + $0x134] sm:$0xf]
    %v313 = vld [vmem:[%s1 + $0x138] sm:$0xf]
    %v314 = vld [vmem:[%s1 + $0x13c] sm:$0xf]
    %v315 = vld [vmem:[%s1 + $0x140] sm:$0xf]
    %v316 = vld [vmem:[%s1 + $0x144] sm:$0xf]
    %v317 = vld [vmem:[%s1 + $0x148] sm:$0xf]
    %v318 = vld [vmem:[%s1 + $0x14c] sm:$0xf]
    %v319 = vld [vmem:[%s1 + $0x150] sm:$0xf]
    %v320 = vld [vmem:[%s1 + $0x154] sm:$0xf]
    %v321 = vld [vmem:[%s1 + $0x158] sm:$0xf]
    %v322 = vld [vmem:[%s1 + $0x15c] sm:$0xf]
    %v323 = vld [vmem:[%s1 + $0x160] sm:$0xf]
    %v324 = vld [vmem:[%s1 + $0x164] sm:$0xf]
    %v325 = vld [vmem:[%s1 + $0x168] sm:$0xf]
    %v326 = vld [vmem:[%s1 + $0x16c] sm:$0xf]
    %v327 = vld [vmem:[%s1 + $0x170] sm:$0xf]
    %v328 = vld [vmem:[%s1 + $0x174] sm:$0xf]
    %v329 = vld [vmem:[%s1 + $0x178] sm:$0xf]
    %v330 = vld [vmem:[%s1 + $0x17c] sm:$0xf]
    %v331 = vld [vmem:[%s1 + $0x180] sm:$0xf]
    %v332 = vld [vmem:[%s1 + $0x184] sm:$0xf]
    %v333 = vld [vmem:[%s1 + $0x188] sm:$0xf]
    %v334 = vld [vmem:[%s1 + $0x18c] sm:$0xf]
    %v335 = vld [vmem:[%s1 + $0x190] sm:$0xf]
    %v336 = vld [vmem:[%s1 + $0x194] sm:$0xf]
    %v337 = vld [vmem:[%s1 + $0x198] sm:$0xf]
    %v338 = vld [vmem:[%s1 + $0x19c] sm:$0xf]
    %v339 = vld [vmem:[%s1 + $0x1a0] sm:$0xf]
    %v340 = vld [vmem:[%s1 + $0x1a4] sm:$0xf]
    %v341 = vld [vmem:[%s1 + $0x1a8] sm:$0xf]
    %v342 = vld [vmem:[%s1 + $0x1ac] sm:$0xf]
    %v343 = vld [vmem:[%s1 + $0x1b0] sm:$0xf]
    %v344 = vld [vmem:[%s1 + $0x1b4] sm:$0xf]
    %v345 = vld [vmem:[%s1 + $0x1b8] sm:$0xf]
    %v346 = vld [vmem:[%s1 + $0x1bc] sm:$0xf]
    %v347 = vld [vmem:[%s1 + $0x1c0] sm:$0xf]
    %v348 = vld [vmem:[%s1 + $0x1c4] sm:$0xf]
    %v349 = vld [vmem:[%s1 + $0x1c8] sm:$0xf]
    %v350 = vld [vmem:[%s1 + $0x1cc] sm:$0xf]
    %v351 = vld [vmem:[%s1 + $0x1d0] sm:$0xf]
    %v352 = vld [vmem:[%s1 + $0x1d4] sm:$0xf]
    %v353 = vld [vmem:[%s1 + $0x1d8] sm:$0xf]
    %v354 = vld [vmem:[%s1 + $0x1dc] sm:$0xf]
    %v355 = vld [vmem:[%s1 + $0x1e0] sm:$0xf]
    %v356 = vld [vmem:[%s1 + $0x1e4] sm:$0xf]
    %v357 = vld [vmem:[%s1 + $0x1e8] sm:$0xf]
    %v358 = vld [vmem:[%s1 + $0x1ec] sm:$0xf]
    %v359 = vld [vmem:[%s1 + $0x1f0] sm:$0xf]
    %v360 = vld [vmem:[%s1 + $0x1f4] sm:$0xf]
    %v361 = vld [vmem:[%s1 + $0x1f8] sm:$0xf]
    %v362 = vld [vmem:[%s1 + $0x1fc] sm:$0xf]
    %v363 = vld [vmem:[%s2] sm:$0x1]
    %v365 = vlaneseq
    %v366 = vshrl.u32 %v365, 7
    %v367 = vsub.s32 0, %v366
    %v368 = vrot.slane %v363, %v367
    %v498 = vunpack.c.l.b16 %v235
    %v499 = vunpack.c.l.b16 %v236
    %v500 = vunpack.c.l.b16 %v237
    %v501 = vunpack.c.l.b16 %v238
    %v502 = vunpack.c.l.b16 %v239
    %v503 = vunpack.c.l.b16 %v240
    %v504 = vunpack.c.l.b16 %v241
    %v505 = vunpack.c.l.b16 %v242
    %v506 = vunpack.c.l.b16 %v243
    %v507 = vunpack.c.l.b16 %v244
    %v508 = vunpack.c.l.b16 %v245
    %v509 = vunpack.c.l.b16 %v246
    %v510 = vunpack.c.l.b16 %v247
    %v511 = vunpack.c.l.b16 %v248
    %v512 = vunpack.c.l.b16 %v249
    %v513 = vunpack.c.l.b16 %v250
    %v514 = vunpack.c.l.b16 %v251
    %v515 = vunpack.c.l.b16 %v252
    %v516 = vunpack.c.l.b16 %v253
    %v517 = vunpack.c.l.b16 %v254
    %v518 = vunpack.c.l.b16 %v255
    %v519 = vunpack.c.l.b16 %v256
    %v520 = vunpack.c.l.b16 %v257
    %v521 = vunpack.c.l.b16 %v258
    %v522 = vunpack.c.l.b16 %v259
    %v523 = vunpack.c.l.b16 %v260
    %v524 = vunpack.c.l.b16 %v261
    %v525 = vunpack.c.l.b16 %v262
    %v526 = vunpack.c.l.b16 %v263
    %v527 = vunpack.c.l.b16 %v264
    %v528 = vunpack.c.l.b16 %v265
    %v529 = vunpack.c.l.b16 %v266
    %v530 = vunpack.c.l.b16 %v267
    %v531 = vunpack.c.l.b16 %v268
    %v532 = vunpack.c.l.b16 %v269
    %v533 = vunpack.c.l.b16 %v270
    %v534 = vunpack.c.l.b16 %v271
    %v535 = vunpack.c.l.b16 %v272
    %v536 = vunpack.c.l.b16 %v273
    %v537 = vunpack.c.l.b16 %v274
    %v538 = vunpack.c.l.b16 %v275
    %v539 = vunpack.c.l.b16 %v276
    %v540 = vunpack.c.l.b16 %v277
    %v541 = vunpack.c.l.b16 %v278
    %v542 = vunpack.c.l.b16 %v279
    %v543 = vunpack.c.l.b16 %v280
    %v544 = vunpack.c.l.b16 %v281
    %v545 = vunpack.c.l.b16 %v282
    %v546 = vunpack.c.l.b16 %v283
    %v547 = vunpack.c.l.b16 %v284
    %v548 = vunpack.c.l.b16 %v285
    %v549 = vunpack.c.l.b16 %v286
    %v550 = vunpack.c.l.b16 %v287
    %v551 = vunpack.c.l.b16 %v288
    %v552 = vunpack.c.l.b16 %v289
    %v553 = vunpack.c.l.b16 %v290
    %v554 = vunpack.c.l.b16 %v291
    %v555 = vunpack.c.l.b16 %v292
    %v556 = vunpack.c.l.b16 %v293
    %v557 = vunpack.c.l.b16 %v294
    %v558 = vunpack.c.l.b16 %v295
    %v559 = vunpack.c.l.b16 %v296
    %v560 = vunpack.c.l.b16 %v297
    %v561 = vunpack.c.l.b16 %v298
    %v562 = vunpack.c.l.b16 %v299
    %v563 = vunpack.c.l.b16 %v300
    %v564 = vunpack.c.l.b16 %v301
    %v565 = vunpack.c.l.b16 %v302
    %v566 = vunpack.c.l.b16 %v303
    %v567 = vunpack.c.l.b16 %v304
    %v568 = vunpack.c.l.b16 %v305
    %v569 = vunpack.c.l.b16 %v306
    %v570 = vunpack.c.l.b16 %v307
    %v571 = vunpack.c.l.b16 %v308
    %v572 = vunpack.c.l.b16 %v309
    %v573 = vunpack.c.l.b16 %v310
    %v574 = vunpack.c.l.b16 %v311
    %v575 = vunpack.c.l.b16 %v312
    %v576 = vunpack.c.l.b16 %v313
    %v577 = vunpack.c.l.b16 %v314
    %v578 = vunpack.c.l.b16 %v315
    %v579 = vunpack.c.l.b16 %v316
    %v580 = vunpack.c.l.b16 %v317
    %v581 = vunpack.c.l.b16 %v318
    %v582 = vunpack.c.l.b16 %v319
    %v583 = vunpack.c.l.b16 %v320
    %v584 = vunpack.c.l.b16 %v321
    %v585 = vunpack.c.l.b16 %v322
    %v586 = vunpack.c.l.b16 %v323
    %v587 = vunpack.c.l.b16 %v324
    %v588 = vunpack.c.l.b16 %v325
    %v589 = vunpack.c.l.b16 %v326
    %v590 = vunpack.c.l.b16 %v327
    %v591 = vunpack.c.l.b16 %v328
    %v592 = vunpack.c.l.b16 %v329
    %v593 = vunpack.c.l.b16 %v330
    %v594 = vunpack.c.l.b16 %v331
    %v595 = vunpack.c.l.b16 %v332
    %v596 = vunpack.c.l.b16 %v333
    %v597 = vunpack.c.l.b16 %v334
    %v598 = vunpack.c.l.b16 %v335
    %v599 = vunpack.c.l.b16 %v336
    %v600 = vunpack.c.l.b16 %v337
    %v601 = vunpack.c.l.b16 %v338
    %v602 = vunpack.c.l.b16 %v339
    %v603 = vunpack.c.l.b16 %v340
    %v604 = vunpack.c.l.b16 %v341
    %v605 = vunpack.c.l.b16 %v342
    %v606 = vunpack.c.l.b16 %v343
    %v607 = vunpack.c.l.b16 %v344
    %v608 = vunpack.c.l.b16 %v345
    %v609 = vunpack.c.l.b16 %v346
    %v610 = vunpack.c.l.b16 %v347
    %v611 = vunpack.c.l.b16 %v348
    %v612 = vunpack.c.l.b16 %v349
    %v613 = vunpack.c.l.b16 %v350
    %v614 = vunpack.c.l.b16 %v351
    %v615 = vunpack.c.l.b16 %v352
    %v616 = vunpack.c.l.b16 %v353
    %v617 = vunpack.c.l.b16 %v354
    %v618 = vunpack.c.l.b16 %v355
    %v619 = vunpack.c.l.b16 %v356
    %v620 = vunpack.c.l.b16 %v357
    %v621 = vunpack.c.l.b16 %v358
    %v622 = vunpack.c.l.b16 %v359
    %v623 = vunpack.c.l.b16 %v360
    %v624 = vunpack.c.l.b16 %v361
    %v625 = vunpack.c.l.b16 %v362
    %v626 = vpack.c.b16 %v499, %v498
    %v627 = vpack.c.b16 %v501, %v500
    %v628 = vpack.c.b16 %v503, %v502
    %v629 = vpack.c.b16 %v505, %v504
    %v630 = vpack.c.b16 %v507, %v506
    %v631 = vpack.c.b16 %v509, %v508
    %v632 = vpack.c.b16 %v511, %v510
    %v633 = vpack.c.b16 %v513, %v512
    %v634 = vpack.c.b16 %v515, %v514
    %v635 = vpack.c.b16 %v517, %v516
    %v636 = vpack.c.b16 %v519, %v518
    %v637 = vpack.c.b16 %v521, %v520
    %v638 = vpack.c.b16 %v523, %v522
    %v639 = vpack.c.b16 %v525, %v524
    %v640 = vpack.c.b16 %v527, %v526
    %v641 = vpack.c.b16 %v529, %v528
    %v642 = vpack.c.b16 %v531, %v530
    %v643 = vpack.c.b16 %v533, %v532
    %v644 = vpack.c.b16 %v535, %v534
    %v645 = vpack.c.b16 %v537, %v536
    %v646 = vpack.c.b16 %v539, %v538
    %v647 = vpack.c.b16 %v541, %v540
    %v648 = vpack.c.b16 %v543, %v542
    %v649 = vpack.c.b16 %v545, %v544
    %v650 = vpack.c.b16 %v547, %v546
    %v651 = vpack.c.b16 %v549, %v548
    %v652 = vpack.c.b16 %v551, %v550
    %v653 = vpack.c.b16 %v553, %v552
    %v654 = vpack.c.b16 %v555, %v554
    %v655 = vpack.c.b16 %v557, %v556
    %v656 = vpack.c.b16 %v559, %v558
    %v657 = vpack.c.b16 %v561, %v560
    %v658 = vpack.c.b16 %v563, %v562
    %v659 = vpack.c.b16 %v565, %v564
    %v660 = vpack.c.b16 %v567, %v566
    %v661 = vpack.c.b16 %v569, %v568
    %v662 = vpack.c.b16 %v571, %v570
    %v663 = vpack.c.b16 %v573, %v572
    %v664 = vpack.c.b16 %v575, %v574
    %v665 = vpack.c.b16 %v577, %v576
    %v666 = vpack.c.b16 %v579, %v578
    %v667 = vpack.c.b16 %v581, %v580
    %v668 = vpack.c.b16 %v583, %v582
    %v669 = vpack.c.b16 %v585, %v584
    %v670 = vpack.c.b16 %v587, %v586
    %v671 = vpack.c.b16 %v589, %v588
    %v672 = vpack.c.b16 %v591, %v590
    %v673 = vpack.c.b16 %v593, %v592
    %v674 = vpack.c.b16 %v595, %v594
    %v675 = vpack.c.b16 %v597, %v596
    %v676 = vpack.c.b16 %v599, %v598
    %v677 = vpack.c.b16 %v601, %v600
    %v678 = vpack.c.b16 %v603, %v602
    %v679 = vpack.c.b16 %v605, %v604
    %v680 = vpack.c.b16 %v607, %v606
    %v681 = vpack.c.b16 %v609, %v608
    %v682 = vpack.c.b16 %v611, %v610
    %v683 = vpack.c.b16 %v613, %v612
    %v684 = vpack.c.b16 %v615, %v614
    %v685 = vpack.c.b16 %v617, %v616
    %v686 = vpack.c.b16 %v619, %v618
    %v687 = vpack.c.b16 %v621, %v620
    %v688 = vpack.c.b16 %v623, %v622
    %v689 = vpack.c.b16 %v625, %v624
    %754 = vmatprep.subr.bf16.mxu0 0
    %755 = vmatpush1.bf16.msra.mxu0 %v626
    %756 = vmatprep.subr.bf16.mxu0 0
    %757 = vmatpush1.bf16.msra.mxu0 %v627
    %758 = vmatprep.subr.bf16.mxu0 0
    %759 = vmatpush1.bf16.msra.mxu0 %v628
    %760 = vmatprep.subr.bf16.mxu0 0
    %761 = vmatpush1.bf16.msra.mxu0 %v629
    %762 = vmatprep.subr.bf16.mxu0 0
    %763 = vmatpush1.bf16.msra.mxu0 %v630
    %764 = vmatprep.subr.bf16.mxu0 0
    %765 = vmatpush1.bf16.msra.mxu0 %v631
    %766 = vmatprep.subr.bf16.mxu0 0
    %767 = vmatpush1.bf16.msra.mxu0 %v632
    %768 = vmatprep.subr.bf16.mxu0 0
    %769 = vmatpush1.bf16.msra.mxu0 %v633
    %770 = vmatprep.subr.bf16.mxu0 0
    %771 = vmatpush1.bf16.msra.mxu0 %v634
    %772 = vmatprep.subr.bf16.mxu0 0
    %773 = vmatpush1.bf16.msra.mxu0 %v635
    %774 = vmatprep.subr.bf16.mxu0 0
    %775 = vmatpush1.bf16.msra.mxu0 %v636
    %776 = vmatprep.subr.bf16.mxu0 0
    %777 = vmatpush1.bf16.msra.mxu0 %v637
    %778 = vmatprep.subr.bf16.mxu0 0
    %779 = vmatpush1.bf16.msra.mxu0 %v638
    %780 = vmatprep.subr.bf16.mxu0 0
    %781 = vmatpush1.bf16.msra.mxu0 %v639
    %782 = vmatprep.subr.bf16.mxu0 0
    %783 = vmatpush1.bf16.msra.mxu0 %v640
    %784 = vmatprep.subr.bf16.mxu0 0
    %785 = vmatpush1.bf16.msra.mxu0 %v641
    %786 = vmatprep.mubr.bf16.mxu0 %v172
    %787 = vmatmul.mubr.bf16.gmra.mrb[0].mxu0 %v171
    %v788 = vpop.f32.mrb[0].mxu0
    %v789 = vadd.f32 %v368, %v788
    %v790 = vpop.f32.mrb[0].mxu0
    %v791 = vpop.f32.mrb[0].mxu0
    %v792 = vadd.f32 %v368, %v791
    %v793 = vpop.f32.mrb[0].mxu0
    %794 = vmatprep.mubr.bf16.mxu0 %v180
    %795 = vmatmul.mubr.bf16.gmra.mrb[0].mxu0 %v179
    %v796 = vpop.f32.mrb[0].mxu0
    %v797 = vadd.f32 %v368, %v796
    %v798 = vpop.f32.mrb[0].mxu0
    %v799 = vpop.f32.mrb[0].mxu0
    %v800 = vadd.f32 %v368, %v799
    %v801 = vpop.f32.mrb[0].mxu0
    %802 = vmatprep.mubr.bf16.mxu0 %v188
    %803 = vmatmul.mubr.bf16.gmra.mrb[0].mxu0 %v187
    %v804 = vpop.f32.mrb[0].mxu0
    %v805 = vadd.f32 %v368, %v804
    %v806 = vpop.f32.mrb[0].mxu0
    %v807 = vpop.f32.mrb[0].mxu0
    %v808 = vadd.f32 %v368, %v807
    %v809 = vpop.f32.mrb[0].mxu0
    %810 = vmatprep.mubr.bf16.mxu0 %v196
    %811 = vmatmul.mubr.bf16.gmra.mrb[0].mxu0 %v195
    %v812 = vpop.f32.mrb[0].mxu0
    %v813 = vadd.f32 %v368, %v812
    %v814 = vpop.f32.mrb[0].mxu0
    %v815 = vpop.f32.mrb[0].mxu0
    %v816 = vadd.f32 %v368, %v815
    %v817 = vpop.f32.mrb[0].mxu0
    %818 = vmatprep.mubr.bf16.mxu0 %v204
    %819 = vmatmul.mubr.bf16.gmra.mrb[0].mxu0 %v203
    %v820 = vpop.f32.mrb[0].mxu0
    %v821 = vadd.f32 %v368, %v820
    %v822 = vpop.f32.mrb[0].mxu0
    %v823 = vpop.f32.mrb[0].mxu0
    %v824 = vadd.f32 %v368, %v823
    %v825 = vpop.f32.mrb[0].mxu0
    %826 = vmatprep.mubr.bf16.mxu0 %v212
    %827 = vmatmul.mubr.bf16.gmra.mrb[0].mxu0 %v211
    %v828 = vpop.f32.mrb[0].mxu0
    %v829 = vadd.f32 %v368, %v828
    %v830 = vpop.f32.mrb[0].mxu0
    %v831 = vpop.f32.mrb[0].mxu0
    %v832 = vadd.f32 %v368, %v831
    %v833 = vpop.f32.mrb[0].mxu0
    %834 = vmatprep.mubr.bf16.mxu0 %v220
    %835 = vmatmul.mubr.bf16.gmra.mrb[0].mxu0 %v219
    %v836 = vpop.f32.mrb[0].mxu0
    %v837 = vadd.f32 %v368, %v836
    %v838 = vpop.f32.mrb[0].mxu0
    %v839 = vpop.f32.mrb[0].mxu0
    %v840 = vadd.f32 %v368, %v839
    %v841 = vpop.f32.mrb[0].mxu0
    %842 = vmatprep.mubr.bf16.mxu0 %v228
    %843 = vmatmul.mubr.bf16.gmra.mrb[0].mxu0 %v227
    %v844 = vpop.f32.mrb[0].mxu0
    %v845 = vadd.f32 %v368, %v844
    %v846 = vpop.f32.mrb[0].mxu0
    %v847 = vpop.f32.mrb[0].mxu0
    %v848 = vadd.f32 %v368, %v847
    %v849 = vpop.f32.mrb[0].mxu0
    %850 = vdwg.mxu0
    %851 = vmatprep.subr.bf16.mxu0 0
    %852 = vmatpush1.bf16.msra.mxu0 %v642
    %853 = vmatprep.subr.bf16.mxu0 0
    %854 = vmatpush1.bf16.msra.mxu0 %v643
    %855 = vmatprep.subr.bf16.mxu0 0
    %856 = vmatpush1.bf16.msra.mxu0 %v644
    %857 = vmatprep.subr.bf16.mxu0 0
    %858 = vmatpush1.bf16.msra.mxu0 %v645
    %859 = vmatprep.subr.bf16.mxu0 0
    %860 = vmatpush1.bf16.msra.mxu0 %v646
    %861 = vmatprep.subr.bf16.mxu0 0
    %862 = vmatpush1.bf16.msra.mxu0 %v647
    %863 = vmatprep.subr.bf16.mxu0 0
    %864 = vmatpush1.bf16.msra.mxu0 %v648
    %865 = vmatprep.subr.bf16.mxu0 0
    %866 = vmatpush1.bf16.msra.mxu0 %v649
    %867 = vmatprep.subr.bf16.mxu0 0
    %868 = vmatpush1.bf16.msra.mxu0 %v650
    %869 = vmatprep.subr.bf16.mxu0 0
    %870 = vmatpush1.bf16.msra.mxu0 %v651
    %871 = vmatprep.subr.bf16.mxu0 0
    %872 = vmatpush1.bf16.msra.mxu0 %v652
    %873 = vmatprep.subr.bf16.mxu0 0
    %874 = vmatpush1.bf16.msra.mxu0 %v653
    %875 = vmatprep.subr.bf16.mxu0 0
    %876 = vmatpush1.bf16.msra.mxu0 %v654
    %877 = vmatprep.subr.bf16.mxu0 0
    %878 = vmatpush1.bf16.msra.mxu0 %v655
    %879 = vmatprep.subr.bf16.mxu0 0
    %880 = vmatpush1.bf16.msra.mxu0 %v656
    %881 = vmatprep.subr.bf16.mxu0 0
    %882 = vmatpush1.bf16.msra.mxu0 %v657
    %883 = vmatprep.mubr.bf16.mxu0 %v174
    %884 = vmatmul.mubr.bf16.gmra.mrb[0].mxu0 %v173
    %v885 = vpop.f32.mrb[0].mxu0
    %v886 = vadd.f32 %v789, %v885
    %v887 = vpop.f32.mrb[0].mxu0
    %v888 = vpop.f32.mrb[0].mxu0
    %v889 = vadd.f32 %v792, %v888
    %v890 = vpop.f32.mrb[0].mxu0
    %891 = vmatprep.mubr.bf16.mxu0 %v182
    %892 = vmatmul.mubr.bf16.gmra.mrb[0].mxu0 %v181
    %v893 = vpop.f32.mrb[0].mxu0
    %v894 = vadd.f32 %v797, %v893
    %v895 = vpop.f32.mrb[0].mxu0
    %v896 = vpop.f32.mrb[0].mxu0
    %v897 = vadd.f32 %v800, %v896
    %v898 = vpop.f32.mrb[0].mxu0
    %899 = vmatprep.mubr.bf16.mxu0 %v190
    %900 = vmatmul.mubr.bf16.gmra.mrb[0].mxu0 %v189
    %v901 = vpop.f32.mrb[0].mxu0
    %v902 = vadd.f32 %v805, %v901
    %v903 = vpop.f32.mrb[0].mxu0
    %v904 = vpop.f32.mrb[0].mxu0
    %v905 = vadd.f32 %v808, %v904
    %v906 = vpop.f32.mrb[0].mxu0
    %907 = vmatprep.mubr.bf16.mxu0 %v198
    %908 = vmatmul.mubr.bf16.gmra.mrb[0].mxu0 %v197
    %v909 = vpop.f32.mrb[0].mxu0
    %v910 = vadd.f32 %v813, %v909
    %v911 = vpop.f32.mrb[0].mxu0
    %v912 = vpop.f32.mrb[0].mxu0
    %v913 = vadd.f32 %v816, %v912
    %v914 = vpop.f32.mrb[0].mxu0
    %915 = vmatprep.mubr.bf16.mxu0 %v206
    %916 = vmatmul.mubr.bf16.gmra.mrb[0].mxu0 %v205
    %v917 = vpop.f32.mrb[0].mxu0
    %v918 = vadd.f32 %v821, %v917
    %v919 = vpop.f32.mrb[0].mxu0
    %v920 = vpop.f32.mrb[0].mxu0
    %v921 = vadd.f32 %v824, %v920
    %v922 = vpop.f32.mrb[0].mxu0
    %923 = vmatprep.mubr.bf16.mxu0 %v214
    %924 = vmatmul.mubr.bf16.gmra.mrb[0].mxu0 %v213
    %v925 = vpop.f32.mrb[0].mxu0
    %v926 = vadd.f32 %v829, %v925
    %v927 = vpop.f32.mrb[0].mxu0
    %v928 = vpop.f32.mrb[0].mxu0
    %v929 = vadd.f32 %v832, %v928
    %v930 = vpop.f32.mrb[0].mxu0
    %931 = vmatprep.mubr.bf16.mxu0 %v222
    %932 = vmatmul.mubr.bf16.gmra.mrb[0].mxu0 %v221
    %v933 = vpop.f32.mrb[0].mxu0
    %v934 = vadd.f32 %v837, %v933
    %v935 = vpop.f32.mrb[0].mxu0
    %v936 = vpop.f32.mrb[0].mxu0
    %v937 = vadd.f32 %v840, %v936
    %v938 = vpop.f32.mrb[0].mxu0
    %939 = vmatprep.mubr.bf16.mxu0 %v230
    %940 = vmatmul.mubr.bf16.gmra.mrb[0].mxu0 %v229
    %v941 = vpop.f32.mrb[0].mxu0
    %v942 = vadd.f32 %v845, %v941
    %v943 = vpop.f32.mrb[0].mxu0
    %v944 = vpop.f32.mrb[0].mxu0
    %v945 = vadd.f32 %v848, %v944
    %v946 = vpop.f32.mrb[0].mxu0
    %947 = vdwg.mxu0
    %948 = vmatprep.subr.bf16.mxu0 0
    %949 = vmatpush1.bf16.msra.mxu0 %v658
    %950 = vmatprep.subr.bf16.mxu0 0
    %951 = vmatpush1.bf16.msra.mxu0 %v659
    %952 = vmatprep.subr.bf16.mxu0 0
    %953 = vmatpush1.bf16.msra.mxu0 %v660
    %954 = vmatprep.subr.bf16.mxu0 0
    %955 = vmatpush1.bf16.msra.mxu0 %v661
    %956 = vmatprep.subr.bf16.mxu0 0
    %957 = vmatpush1.bf16.msra.mxu0 %v662
    %958 = vmatprep.subr.bf16.mxu0 0
    %959 = vmatpush1.bf16.msra.mxu0 %v663
    %960 = vmatprep.subr.bf16.mxu0 0
    %961 = vmatpush1.bf16.msra.mxu0 %v664
    %962 = vmatprep.subr.bf16.mxu0 0
    %963 = vmatpush1.bf16.msra.mxu0 %v665
    %964 = vmatprep.subr.bf16.mxu0 0
    %965 = vmatpush1.bf16.msra.mxu0 %v666
    %966 = vmatprep.subr.bf16.mxu0 0
    %967 = vmatpush1.bf16.msra.mxu0 %v667
    %968 = vmatprep.subr.bf16.mxu0 0
    %969 = vmatpush1.bf16.msra.mxu0 %v668
    %970 = vmatprep.subr.bf16.mxu0 0
    %971 = vmatpush1.bf16.msra.mxu0 %v669
    %972 = vmatprep.subr.bf16.mxu0 0
    %973 = vmatpush1.bf16.msra.mxu0 %v670
    %974 = vmatprep.subr.bf16.mxu0 0
    %975 = vmatpush1.bf16.msra.mxu0 %v671
    %976 = vmatprep.subr.bf16.mxu0 0
    %977 = vmatpush1.bf16.msra.mxu0 %v672
    %978 = vmatprep.subr.bf16.mxu0 0
    %979 = vmatpush1.bf16.msra.mxu0 %v673
    %980 = vmatprep.mubr.bf16.mxu0 %v176
    %981 = vmatmul.mubr.bf16.gmra.mrb[0].mxu0 %v175
    %v982 = vpop.f32.mrb[0].mxu0
    %v983 = vadd.f32 %v886, %v982
    %v984 = vpop.f32.mrb[0].mxu0
    %v985 = vpop.f32.mrb[0].mxu0
    %v986 = vadd.f32 %v889, %v985
    %v987 = vpop.f32.mrb[0].mxu0
    %988 = vmatprep.mubr.bf16.mxu0 %v184
    %989 = vmatmul.mubr.bf16.gmra.mrb[0].mxu0 %v183
    %v990 = vpop.f32.mrb[0].mxu0
    %v991 = vadd.f32 %v894, %v990
    %v992 = vpop.f32.mrb[0].mxu0
    %v993 = vpop.f32.mrb[0].mxu0
    %v994 = vadd.f32 %v897, %v993
    %v995 = vpop.f32.mrb[0].mxu0
    %996 = vmatprep.mubr.bf16.mxu0 %v192
    %997 = vmatmul.mubr.bf16.gmra.mrb[0].mxu0 %v191
    %v998 = vpop.f32.mrb[0].mxu0
    %v999 = vadd.f32 %v902, %v998
    %v1000 = vpop.f32.mrb[0].mxu0
    %v1001 = vpop.f32.mrb[0].mxu0
    %v1002 = vadd.f32 %v905, %v1001
    %v1003 = vpop.f32.mrb[0].mxu0
    %1004 = vmatprep.mubr.bf16.mxu0 %v200
    %1005 = vmatmul.mubr.bf16.gmra.mrb[0].mxu0 %v199
    %v1006 = vpop.f32.mrb[0].mxu0
    %v1007 = vadd.f32 %v910, %v1006
    %v1008 = vpop.f32.mrb[0].mxu0
    %v1009 = vpop.f32.mrb[0].mxu0
    %v1010 = vadd.f32 %v913, %v1009
    %v1011 = vpop.f32.mrb[0].mxu0
    %1012 = vmatprep.mubr.bf16.mxu0 %v208
    %1013 = vmatmul.mubr.bf16.gmra.mrb[0].mxu0 %v207
    %v1014 = vpop.f32.mrb[0].mxu0
    %v1015 = vadd.f32 %v918, %v1014
    %v1016 = vpop.f32.mrb[0].mxu0
    %v1017 = vpop.f32.mrb[0].mxu0
    %v1018 = vadd.f32 %v921, %v1017
    %v1019 = vpop.f32.mrb[0].mxu0
    %1020 = vmatprep.mubr.bf16.mxu0 %v216
    %1021 = vmatmul.mubr.bf16.gmra.mrb[0].mxu0 %v215
    %v1022 = vpop.f32.mrb[0].mxu0
    %v1023 = vadd.f32 %v926, %v1022
    %v1024 = vpop.f32.mrb[0].mxu0
    %v1025 = vpop.f32.mrb[0].mxu0
    %v1026 = vadd.f32 %v929, %v1025
    %v1027 = vpop.f32.mrb[0].mxu0
    %1028 = vmatprep.mubr.bf16.mxu0 %v224
    %1029 = vmatmul.mubr.bf16.gmra.mrb[0].mxu0 %v223
    %v1030 = vpop.f32.mrb[0].mxu0
    %v1031 = vadd.f32 %v934, %v1030
    %v1032 = vpop.f32.mrb[0].mxu0
    %v1033 = vpop.f32.mrb[0].mxu0
    %v1034 = vadd.f32 %v937, %v1033
    %v1035 = vpop.f32.mrb[0].mxu0
    %1036 = vmatprep.mubr.bf16.mxu0 %v232
    %1037 = vmatmul.mubr.bf16.gmra.mrb[0].mxu0 %v231
    %v1038 = vpop.f32.mrb[0].mxu0
    %v1039 = vadd.f32 %v942, %v1038
    %v1040 = vpop.f32.mrb[0].mxu0
    %v1041 = vpop.f32.mrb[0].mxu0
    %v1042 = vadd.f32 %v945, %v1041
    %v1043 = vpop.f32.mrb[0].mxu0
    %1044 = vdwg.mxu0
    %1045 = vmatprep.subr.bf16.mxu0 0
    %1046 = vmatpush1.bf16.msra.mxu0 %v674
    %1047 = vmatprep.subr.bf16.mxu0 0
    %1048 = vmatpush1.bf16.msra.mxu0 %v675
    %1049 = vmatprep.subr.bf16.mxu0 0
    %1050 = vmatpush1.bf16.msra.mxu0 %v676
    %1051 = vmatprep.subr.bf16.mxu0 0
    %1052 = vmatpush1.bf16.msra.mxu0 %v677
    %1053 = vmatprep.subr.bf16.mxu0 0
    %1054 = vmatpush1.bf16.msra.mxu0 %v678
    %1055 = vmatprep.subr.bf16.mxu0 0
    %1056 = vmatpush1.bf16.msra.mxu0 %v679
    %1057 = vmatprep.subr.bf16.mxu0 0
    %1058 = vmatpush1.bf16.msra.mxu0 %v680
    %1059 = vmatprep.subr.bf16.mxu0 0
    %1060 = vmatpush1.bf16.msra.mxu0 %v681
    %1061 = vmatprep.subr.bf16.mxu0 0
    %1062 = vmatpush1.bf16.msra.mxu0 %v682
    %1063 = vmatprep.subr.bf16.mxu0 0
    %1064 = vmatpush1.bf16.msra.mxu0 %v683
    %1065 = vmatprep.subr.bf16.mxu0 0
    %1066 = vmatpush1.bf16.msra.mxu0 %v684
    %1067 = vmatprep.subr.bf16.mxu0 0
    %1068 = vmatpush1.bf16.msra.mxu0 %v685
    %1069 = vmatprep.subr.bf16.mxu0 0
    %1070 = vmatpush1.bf16.msra.mxu0 %v686
    %1071 = vmatprep.subr.bf16.mxu0 0
    %1072 = vmatpush1.bf16.msra.mxu0 %v687
    %1073 = vmatprep.subr.bf16.mxu0 0
    %1074 = vmatpush1.bf16.msra.mxu0 %v688
    %1075 = vmatprep.subr.bf16.mxu0 0
    %1076 = vmatpush1.bf16.msra.mxu0 %v689
    %1077 = vmatprep.mubr.bf16.mxu0 %v178
    %1078 = vmatmul.mubr.bf16.gmra.mrb[0].mxu0 %v177
    %v1079 = vpop.f32.mrb[0].mxu0
    %v1080 = vadd.f32 %v983, %v1079
    %v1081 = vpop.f32.mrb[0].mxu0
    %v1082 = vpop.f32.mrb[0].mxu0
    %v1083 = vadd.f32 %v986, %v1082
    %v1084 = vpop.f32.mrb[0].mxu0
    %1085 = vmatprep.mubr.bf16.mxu0 %v186
    %1086 = vmatmul.mubr.bf16.gmra.mrb[0].mxu0 %v185
    %v1087 = vpop.f32.mrb[0].mxu0
    %v1088 = vadd.f32 %v991, %v1087
    %v1089 = vpop.f32.mrb[0].mxu0
    %v1090 = vpop.f32.mrb[0].mxu0
    %v1091 = vadd.f32 %v994, %v1090
    %v1092 = vpop.f32.mrb[0].mxu0
    %1093 = vmatprep.mubr.bf16.mxu0 %v194
    %1094 = vmatmul.mubr.bf16.gmra.mrb[0].mxu0 %v193
    %v1095 = vpop.f32.mrb[0].mxu0
    %v1096 = vadd.f32 %v999, %v1095
    %v1097 = vpop.f32.mrb[0].mxu0
    %v1098 = vpop.f32.mrb[0].mxu0
    %v1099 = vadd.f32 %v1002, %v1098
    %v1100 = vpop.f32.mrb[0].mxu0
    %1101 = vmatprep.mubr.bf16.mxu0 %v202
    %1102 = vmatmul.mubr.bf16.gmra.mrb[0].mxu0 %v201
    %v1103 = vpop.f32.mrb[0].mxu0
    %v1104 = vadd.f32 %v1007, %v1103
    %v1105 = vpop.f32.mrb[0].mxu0
    %v1106 = vpop.f32.mrb[0].mxu0
    %v1107 = vadd.f32 %v1010, %v1106
    %v1108 = vpop.f32.mrb[0].mxu0
    %1109 = vmatprep.mubr.bf16.mxu0 %v210
    %1110 = vmatmul.mubr.bf16.gmra.mrb[0].mxu0 %v209
    %v1111 = vpop.f32.mrb[0].mxu0
    %v1112 = vadd.f32 %v1015, %v1111
    %v1113 = vpop.f32.mrb[0].mxu0
    %v1114 = vpop.f32.mrb[0].mxu0
    %v1115 = vadd.f32 %v1018, %v1114
    %v1116 = vpop.f32.mrb[0].mxu0
    %1117 = vmatprep.mubr.bf16.mxu0 %v218
    %1118 = vmatmul.mubr.bf16.gmra.mrb[0].mxu0 %v217
    %v1119 = vpop.f32.mrb[0].mxu0
    %v1120 = vadd.f32 %v1023, %v1119
    %v1121 = vpop.f32.mrb[0].mxu0
    %v1122 = vpop.f32.mrb[0].mxu0
    %v1123 = vadd.f32 %v1026, %v1122
    %v1124 = vpop.f32.mrb[0].mxu0
    %1125 = vmatprep.mubr.bf16.mxu0 %v226
    %1126 = vmatmul.mubr.bf16.gmra.mrb[0].mxu0 %v225
    %v1127 = vpop.f32.mrb[0].mxu0
    %v1128 = vadd.f32 %v1031, %v1127
    %v1129 = vpop.f32.mrb[0].mxu0
    %v1130 = vpop.f32.mrb[0].mxu0
    %v1131 = vadd.f32 %v1034, %v1130
    %v1132 = vpop.f32.mrb[0].mxu0
    %1133 = vmatprep.mubr.bf16.mxu0 %v234
    %1134 = vmatmul.mubr.bf16.gmra.mrb[0].mxu0 %v233
    %v1135 = vpop.f32.mrb[0].mxu0
    %v1136 = vadd.f32 %v1039, %v1135
    %v1137 = vpop.f32.mrb[0].mxu0
    %v1138 = vpop.f32.mrb[0].mxu0
    %v1139 = vadd.f32 %v1042, %v1138
    %v1140 = vpop.f32.mrb[0].mxu0
    %1141 = vdwg.mxu0
    %v1142 = vmul.f32 %v1080, 0.01
    %v1143 = vmul.f32 %v1083, 0.01
    %v1144 = vmul.f32 %v1088, 0.01
    %v1145 = vmul.f32 %v1091, 0.01
    %v1146 = vmul.f32 %v1096, 0.01
    %v1147 = vmul.f32 %v1099, 0.01
    %v1148 = vmul.f32 %v1104, 0.01
    %v1149 = vmul.f32 %v1107, 0.01
    %v1150 = vmul.f32 %v1112, 0.01
    %v1151 = vmul.f32 %v1115, 0.01
    %v1152 = vmul.f32 %v1120, 0.01
    %v1153 = vmul.f32 %v1123, 0.01
    %v1154 = vmul.f32 %v1128, 0.01
    %v1155 = vmul.f32 %v1131, 0.01
    %v1156 = vmul.f32 %v1136, 0.01
    %v1157 = vmul.f32 %v1139, 0.01
    %v1158 = vmax.f32 %v1080, %v1142
    %v1159 = vmax.f32 %v1083, %v1143
    %v1160 = vmax.f32 %v1088, %v1144
    %v1161 = vmax.f32 %v1091, %v1145
    %v1162 = vmax.f32 %v1096, %v1146
    %v1163 = vmax.f32 %v1099, %v1147
    %v1164 = vmax.f32 %v1104, %v1148
    %v1165 = vmax.f32 %v1107, %v1149
    %v1166 = vmax.f32 %v1112, %v1150
    %v1167 = vmax.f32 %v1115, %v1151
    %v1168 = vmax.f32 %v1120, %v1152
    %v1169 = vmax.f32 %v1123, %v1153
    %v1170 = vmax.f32 %v1128, %v1154
    %v1171 = vmax.f32 %v1131, %v1155
    %v1172 = vmax.f32 %v1136, %v1156
    %v1173 = vmax.f32 %v1139, %v1157
    %v1174 = vpack.c.bf16 %v1159, %v1158
    %v1175 = vpack.c.bf16 %v1161, %v1160
    %v1176 = vpack.c.bf16 %v1163, %v1162
    %v1177 = vpack.c.bf16 %v1165, %v1164
    %v1178 = vpack.c.bf16 %v1167, %v1166
    %v1179 = vpack.c.bf16 %v1169, %v1168
    %v1180 = vpack.c.bf16 %v1171, %v1170
    %v1181 = vpack.c.bf16 %v1173, %v1172
    %v1182 = vld [vmem:[%s3] sm:$0xf]
    %v1183 = vld [vmem:[%s3 + $0x4] sm:$0xf]
    %v1184 = vld [vmem:[%s3 + $0x8] sm:$0xf]
    %v1185 = vld [vmem:[%s3 + $0xc] sm:$0xf]
    %v1186 = vld [vmem:[%s4] sm:$0x1]
    %v1188 = vlaneseq
    %v1189 = vshrl.u32 %v1188, 7
    %v1190 = vsub.s32 0, %v1189
    %v1191 = vrot.slane %v1186, %v1190
    %v1197 = vunpack.c.l.b16 %v1182
    %v1198 = vunpack.c.l.b16 %v1183
    %v1199 = vunpack.c.l.b16 %v1184
    %v1200 = vunpack.c.l.b16 %v1185
    %v1201 = vpack.c.b16 %v1198, %v1197
    %v1202 = vpack.c.b16 %v1200, %v1199
    %vm1205 = vcmask 261120
    %v1207 = vsel %vm1205, %v1174, 0
    %v1210 = vsel %vm1205, %v1175, 0
    %v1213 = vsel %vm1205, %v1176, 0
    %v1216 = vsel %vm1205, %v1177, 0
    %v1219 = vsel %vm1205, %v1178, 0
    %v1222 = vsel %vm1205, %v1179, 0
    %v1225 = vsel %vm1205, %v1180, 0
    %v1228 = vsel %vm1205, %v1181, 0
    %1230 = vmatprep.subr.bf16.mxu0 0
    %1231 = vmatpush1.bf16.msra.mxu0 %v1201
    %1232 = vmatprep.subr.bf16.mxu0 0
    %1233 = vmatpush1.bf16.msra.mxu0 %v1202
    %1234 = vmatprep.subr.bf16.mxu0 0
    %1235 = vmatpush1.bf16.msra.mxu0 0
    %1236 = vmatprep.subr.bf16.mxu0 0
    %1237 = vmatpush1.bf16.msra.mxu0 0
    %1238 = vmatprep.subr.bf16.mxu0 0
    %1239 = vmatpush1.bf16.msra.mxu0 0
    %1240 = vmatprep.subr.bf16.mxu0 0
    %1241 = vmatpush1.bf16.msra.mxu0 0
    %1242 = vmatprep.subr.bf16.mxu0 0
    %1243 = vmatpush1.bf16.msra.mxu0 0
    %1244 = vmatprep.subr.bf16.mxu0 0
    %1245 = vmatpush1.bf16.msra.mxu0 0
    %1246 = vmatprep.subr.bf16.mxu0 0
    %1247 = vmatpush1.bf16.msra.mxu0 0
    %1248 = vmatprep.subr.bf16.mxu0 0
    %1249 = vmatpush1.bf16.msra.mxu0 0
    %1250 = vmatprep.subr.bf16.mxu0 0
    %1251 = vmatpush1.bf16.msra.mxu0 0
    %1252 = vmatprep.subr.bf16.mxu0 0
    %1253 = vmatpush1.bf16.msra.mxu0 0
    %1254 = vmatprep.subr.bf16.mxu0 0
    %1255 = vmatpush1.bf16.msra.mxu0 0
    %1256 = vmatprep.subr.bf16.mxu0 0
    %1257 = vmatpush1.bf16.msra.mxu0 0
    %1258 = vmatprep.subr.bf16.mxu0 0
    %1259 = vmatpush1.bf16.msra.mxu0 0
    %1260 = vmatprep.subr.bf16.mxu0 0
    %1261 = vmatpush1.bf16.msra.mxu0 0
    %1262 = vmatprep.mubr.bf16.mxu0 0
    %1263 = vmatmul.mubr.bf16.gmra.mrb[0].mxu0 %v1207
    %v1264 = vpop.f32.mrb[0].mxu0
    %v1265 = vadd.f32 %v1191, %v1264
    %v1266 = vpop.f32.mrb[0].mxu0
    %v1267 = vpop.f32.mrb[0].mxu0
    %v1268 = vadd.f32 %v1191, %v1267
    %v1269 = vpop.f32.mrb[0].mxu0
    %1270 = vmatprep.mubr.bf16.mxu0 0
    %1271 = vmatmul.mubr.bf16.gmra.mrb[0].mxu0 %v1210
    %v1272 = vpop.f32.mrb[0].mxu0
    %v1273 = vadd.f32 %v1191, %v1272
    %v1274 = vpop.f32.mrb[0].mxu0
    %v1275 = vpop.f32.mrb[0].mxu0
    %v1276 = vadd.f32 %v1191, %v1275
    %v1277 = vpop.f32.mrb[0].mxu0
    %1278 = vmatprep.mubr.bf16.mxu0 0
    %1279 = vmatmul.mubr.bf16.gmra.mrb[0].mxu0 %v1213
    %v1280 = vpop.f32.mrb[0].mxu0
    %v1281 = vadd.f32 %v1191, %v1280
    %v1282 = vpop.f32.mrb[0].mxu0
    %v1283 = vpop.f32.mrb[0].mxu0
    %v1284 = vadd.f32 %v1191, %v1283
    %v1285 = vpop.f32.mrb[0].mxu0
    %1286 = vmatprep.mubr.bf16.mxu0 0
    %1287 = vmatmul.mubr.bf16.gmra.mrb[0].mxu0 %v1216
    %v1288 = vpop.f32.mrb[0].mxu0
    %v1289 = vadd.f32 %v1191, %v1288
    %v1290 = vpop.f32.mrb[0].mxu0
    %v1291 = vpop.f32.mrb[0].mxu0
    %v1292 = vadd.f32 %v1191, %v1291
    %v1293 = vpop.f32.mrb[0].mxu0
    %1294 = vmatprep.mubr.bf16.mxu0 0
    %1295 = vmatmul.mubr.bf16.gmra.mrb[0].mxu0 %v1219
    %v1296 = vpop.f32.mrb[0].mxu0
    %v1297 = vadd.f32 %v1191, %v1296
    %v1298 = vpop.f32.mrb[0].mxu0
    %v1299 = vpop.f32.mrb[0].mxu0
    %v1300 = vadd.f32 %v1191, %v1299
    %v1301 = vpop.f32.mrb[0].mxu0
    %1302 = vmatprep.mubr.bf16.mxu0 0
    %1303 = vmatmul.mubr.bf16.gmra.mrb[0].mxu0 %v1222
    %v1304 = vpop.f32.mrb[0].mxu0
    %v1305 = vadd.f32 %v1191, %v1304
    %v1306 = vpop.f32.mrb[0].mxu0
    %v1307 = vpop.f32.mrb[0].mxu0
    %v1308 = vadd.f32 %v1191, %v1307
    %v1309 = vpop.f32.mrb[0].mxu0
    %1310 = vmatprep.mubr.bf16.mxu0 0
    %1311 = vmatmul.mubr.bf16.gmra.mrb[0].mxu0 %v1225
    %v1312 = vpop.f32.mrb[0].mxu0
    %v1313 = vadd.f32 %v1191, %v1312
    %v1314 = vpop.f32.mrb[0].mxu0
    %v1315 = vpop.f32.mrb[0].mxu0
    %v1316 = vadd.f32 %v1191, %v1315
    %v1317 = vpop.f32.mrb[0].mxu0
    %1318 = vmatprep.mubr.bf16.mxu0 0
    %1319 = vmatmul.mubr.bf16.gmra.mrb[0].mxu0 %v1228
    %v1320 = vpop.f32.mrb[0].mxu0
    %v1321 = vadd.f32 %v1191, %v1320
    %v1322 = vpop.f32.mrb[0].mxu0
    %v1323 = vpop.f32.mrb[0].mxu0
    %v1324 = vadd.f32 %v1191, %v1323
    %v1325 = vpop.f32.mrb[0].mxu0
    %1326 = vdwg.mxu0
    %v1327 = vmul.f32 %v1265, 0.01
    %v1328 = vmul.f32 %v1268, 0.01
    %v1329 = vmul.f32 %v1273, 0.01
    %v1330 = vmul.f32 %v1276, 0.01
    %v1331 = vmul.f32 %v1281, 0.01
    %v1332 = vmul.f32 %v1284, 0.01
    %v1333 = vmul.f32 %v1289, 0.01
    %v1334 = vmul.f32 %v1292, 0.01
    %v1335 = vmul.f32 %v1297, 0.01
    %v1336 = vmul.f32 %v1300, 0.01
    %v1337 = vmul.f32 %v1305, 0.01
    %v1338 = vmul.f32 %v1308, 0.01
    %v1339 = vmul.f32 %v1313, 0.01
    %v1340 = vmul.f32 %v1316, 0.01
    %v1341 = vmul.f32 %v1321, 0.01
    %v1342 = vmul.f32 %v1324, 0.01
    %v1343 = vmax.f32 %v1265, %v1327
    %v1344 = vmax.f32 %v1268, %v1328
    %v1345 = vmax.f32 %v1273, %v1329
    %v1346 = vmax.f32 %v1276, %v1330
    %v1347 = vmax.f32 %v1281, %v1331
    %v1348 = vmax.f32 %v1284, %v1332
    %v1349 = vmax.f32 %v1289, %v1333
    %v1350 = vmax.f32 %v1292, %v1334
    %v1351 = vmax.f32 %v1297, %v1335
    %v1352 = vmax.f32 %v1300, %v1336
    %v1353 = vmax.f32 %v1305, %v1337
    %v1354 = vmax.f32 %v1308, %v1338
    %v1355 = vmax.f32 %v1313, %v1339
    %v1356 = vmax.f32 %v1316, %v1340
    %v1357 = vmax.f32 %v1321, %v1341
    %v1358 = vmax.f32 %v1324, %v1342
    %v1359 = vpack.c.bf16 %v1344, %v1343
    %v1360 = vpack.c.bf16 %v1346, %v1345
    %v1361 = vpack.c.bf16 %v1348, %v1347
    %v1362 = vpack.c.bf16 %v1350, %v1349
    %v1363 = vpack.c.bf16 %v1352, %v1351
    %v1364 = vpack.c.bf16 %v1354, %v1353
    %v1365 = vpack.c.bf16 %v1356, %v1355
    %v1366 = vpack.c.bf16 %v1358, %v1357
    %v1367 = vld [vmem:[%s5] sm:$0xf]
    %v1368 = vld [vmem:[%s5 + $0x4] sm:$0xf]
    %v1369 = vld [vmem:[%s5 + $0x8] sm:$0xf]
    %v1370 = vld [vmem:[%s5 + $0xc] sm:$0xf]
    %v1371 = vld [vmem:[%s6] sm:$0x1]
    %v1373 = vlaneseq
    %v1374 = vshrl.u32 %v1373, 7
    %v1375 = vsub.s32 0, %v1374
    %v1376 = vrot.slane %v1371, %v1375
    %v1382 = vunpack.c.l.b16 %v1367
    %v1383 = vunpack.c.l.b16 %v1368
    %v1384 = vunpack.c.l.b16 %v1369
    %v1385 = vunpack.c.l.b16 %v1370
    %v1386 = vpack.c.b16 %v1383, %v1382
    %v1387 = vpack.c.b16 %v1385, %v1384
    %v1391 = vsel %vm1205, %v1359, 0
    %v1394 = vsel %vm1205, %v1360, 0
    %v1397 = vsel %vm1205, %v1361, 0
    %v1400 = vsel %vm1205, %v1362, 0
    %v1403 = vsel %vm1205, %v1363, 0
    %v1406 = vsel %vm1205, %v1364, 0
    %v1409 = vsel %vm1205, %v1365, 0
    %v1412 = vsel %vm1205, %v1366, 0
    %1414 = vmatprep.subr.bf16.mxu0 0
    %1415 = vmatpush1.bf16.msra.mxu0 %v1386
    %1416 = vmatprep.subr.bf16.mxu0 0
    %1417 = vmatpush1.bf16.msra.mxu0 %v1387
    %1418 = vmatprep.subr.bf16.mxu0 0
    %1419 = vmatpush1.bf16.msra.mxu0 0
    %1420 = vmatprep.subr.bf16.mxu0 0
    %1421 = vmatpush1.bf16.msra.mxu0 0
    %1422 = vmatprep.subr.bf16.mxu0 0
    %1423 = vmatpush1.bf16.msra.mxu0 0
    %1424 = vmatprep.subr.bf16.mxu0 0
    %1425 = vmatpush1.bf16.msra.mxu0 0
    %1426 = vmatprep.subr.bf16.mxu0 0
    %1427 = vmatpush1.bf16.msra.mxu0 0
    %1428 = vmatprep.subr.bf16.mxu0 0
    %1429 = vmatpush1.bf16.msra.mxu0 0
    %1430 = vmatprep.subr.bf16.mxu0 0
    %1431 = vmatpush1.bf16.msra.mxu0 0
    %1432 = vmatprep.subr.bf16.mxu0 0
    %1433 = vmatpush1.bf16.msra.mxu0 0
    %1434 = vmatprep.subr.bf16.mxu0 0
    %1435 = vmatpush1.bf16.msra.mxu0 0
    %1436 = vmatprep.subr.bf16.mxu0 0
    %1437 = vmatpush1.bf16.msra.mxu0 0
    %1438 = vmatprep.subr.bf16.mxu0 0
    %1439 = vmatpush1.bf16.msra.mxu0 0
    %1440 = vmatprep.subr.bf16.mxu0 0
    %1441 = vmatpush1.bf16.msra.mxu0 0
    %1442 = vmatprep.subr.bf16.mxu0 0
    %1443 = vmatpush1.bf16.msra.mxu0 0
    %1444 = vmatprep.subr.bf16.mxu0 0
    %1445 = vmatpush1.bf16.msra.mxu0 0
    %1446 = vmatprep.mubr.bf16.mxu0 0
    %1447 = vmatmul.mubr.bf16.gmra.mrb[0].mxu0 %v1391
    %v1448 = vpop.f32.mrb[0].mxu0
    %v1449 = vadd.f32 %v1376, %v1448
    %v1450 = vpop.f32.mrb[0].mxu0
    %v1451 = vpop.f32.mrb[0].mxu0
    %v1452 = vadd.f32 %v1376, %v1451
    %v1453 = vpop.f32.mrb[0].mxu0
    %1454 = vmatprep.mubr.bf16.mxu0 0
    %1455 = vmatmul.mubr.bf16.gmra.mrb[0].mxu0 %v1394
    %v1456 = vpop.f32.mrb[0].mxu0
    %v1457 = vadd.f32 %v1376, %v1456
    %v1458 = vpop.f32.mrb[0].mxu0
    %v1459 = vpop.f32.mrb[0].mxu0
    %v1460 = vadd.f32 %v1376, %v1459
    %v1461 = vpop.f32.mrb[0].mxu0
    %1462 = vmatprep.mubr.bf16.mxu0 0
    %1463 = vmatmul.mubr.bf16.gmra.mrb[0].mxu0 %v1397
    %v1464 = vpop.f32.mrb[0].mxu0
    %v1465 = vadd.f32 %v1376, %v1464
    %v1466 = vpop.f32.mrb[0].mxu0
    %v1467 = vpop.f32.mrb[0].mxu0
    %v1468 = vadd.f32 %v1376, %v1467
    %v1469 = vpop.f32.mrb[0].mxu0
    %1470 = vmatprep.mubr.bf16.mxu0 0
    %1471 = vmatmul.mubr.bf16.gmra.mrb[0].mxu0 %v1400
    %v1472 = vpop.f32.mrb[0].mxu0
    %v1473 = vadd.f32 %v1376, %v1472
    %v1474 = vpop.f32.mrb[0].mxu0
    %v1475 = vpop.f32.mrb[0].mxu0
    %v1476 = vadd.f32 %v1376, %v1475
    %v1477 = vpop.f32.mrb[0].mxu0
    %1478 = vmatprep.mubr.bf16.mxu0 0
    %1479 = vmatmul.mubr.bf16.gmra.mrb[0].mxu0 %v1403
    %v1480 = vpop.f32.mrb[0].mxu0
    %v1481 = vadd.f32 %v1376, %v1480
    %v1482 = vpop.f32.mrb[0].mxu0
    %v1483 = vpop.f32.mrb[0].mxu0
    %v1484 = vadd.f32 %v1376, %v1483
    %v1485 = vpop.f32.mrb[0].mxu0
    %1486 = vmatprep.mubr.bf16.mxu0 0
    %1487 = vmatmul.mubr.bf16.gmra.mrb[0].mxu0 %v1406
    %v1488 = vpop.f32.mrb[0].mxu0
    %v1489 = vadd.f32 %v1376, %v1488
    %v1490 = vpop.f32.mrb[0].mxu0
    %v1491 = vpop.f32.mrb[0].mxu0
    %v1492 = vadd.f32 %v1376, %v1491
    %v1493 = vpop.f32.mrb[0].mxu0
    %1494 = vmatprep.mubr.bf16.mxu0 0
    %1495 = vmatmul.mubr.bf16.gmra.mrb[0].mxu0 %v1409
    %v1496 = vpop.f32.mrb[0].mxu0
    %v1497 = vadd.f32 %v1376, %v1496
    %v1498 = vpop.f32.mrb[0].mxu0
    %v1499 = vpop.f32.mrb[0].mxu0
    %v1500 = vadd.f32 %v1376, %v1499
    %v1501 = vpop.f32.mrb[0].mxu0
    %1502 = vmatprep.mubr.bf16.mxu0 0
    %1503 = vmatmul.mubr.bf16.gmra.mrb[0].mxu0 %v1412
    %v1504 = vpop.f32.mrb[0].mxu0
    %v1505 = vadd.f32 %v1376, %v1504
    %v1506 = vpop.f32.mrb[0].mxu0
    %v1507 = vpop.f32.mrb[0].mxu0
    %v1508 = vadd.f32 %v1376, %v1507
    %v1509 = vpop.f32.mrb[0].mxu0
    %1510 = vdwg.mxu0
    %vm1511 = vcmask 64512
    %1512 = vst.msk [vmem:[%s7] sm:$0xff] %vm1511, %v1449
    %1513 = vst.msk [vmem:[%s7 + $0x8] sm:$0xff] %vm1511, %v1452
    %1514 = vst.msk [vmem:[%s7 + $0x10] sm:$0xff] %vm1511, %v1457
    %1515 = vst.msk [vmem:[%s7 + $0x18] sm:$0xff] %vm1511, %v1460
    %1516 = vst.msk [vmem:[%s7 + $0x20] sm:$0xff] %vm1511, %v1465
    %1517 = vst.msk [vmem:[%s7 + $0x28] sm:$0xff] %vm1511, %v1468
    %1518 = vst.msk [vmem:[%s7 + $0x30] sm:$0xff] %vm1511, %v1473
    %1519 = vst.msk [vmem:[%s7 + $0x38] sm:$0xff] %vm1511, %v1476
    %1520 = vst.msk [vmem:[%s7 + $0x40] sm:$0xff] %vm1511, %v1481
    %1521 = vst.msk [vmem:[%s7 + $0x48] sm:$0xff] %vm1511, %v1484
    %1522 = vst.msk [vmem:[%s7 + $0x50] sm:$0xff] %vm1511, %v1489
    %1523 = vst.msk [vmem:[%s7 + $0x58] sm:$0xff] %vm1511, %v1492
    %1524 = vst.msk [vmem:[%s7 + $0x60] sm:$0xff] %vm1511, %v1497
    %1525 = vst.msk [vmem:[%s7 + $0x68] sm:$0xff] %vm1511, %v1500
    %1526 = vst.msk [vmem:[%s7 + $0x70] sm:$0xff] %vm1511, %v1505
    %1527 = vst.msk [vmem:[%s7 + $0x78] sm:$0xff] %vm1511, %v1508
    %v1528 = vmul.f32 %v1449, %v1449
    %v1529 = vmul.f32 %v1452, %v1452
    %v1530 = vmul.f32 %v1457, %v1457
    %v1531 = vmul.f32 %v1460, %v1460
    %v1532 = vmul.f32 %v1465, %v1465
    %v1533 = vmul.f32 %v1468, %v1468
    %v1534 = vmul.f32 %v1473, %v1473
    %v1535 = vmul.f32 %v1476, %v1476
    %v1536 = vmul.f32 %v1481, %v1481
    %v1537 = vmul.f32 %v1484, %v1484
    %v1538 = vmul.f32 %v1489, %v1489
    %v1539 = vmul.f32 %v1492, %v1492
    %v1540 = vmul.f32 %v1497, %v1497
    %v1541 = vmul.f32 %v1500, %v1500
    %v1542 = vmul.f32 %v1505, %v1505
    %v1543 = vmul.f32 %v1508, %v1508
    %v1544 = vsel %vm1511, %v1528, 0.0
    %1545 = vadd.xlane.f32.xlu0 %v1544
    %v1546 = vpop.xlane.xlu0 %1545
    %v1547 = vsel %vm1511, %v1529, 0.0
    %1548 = vadd.xlane.f32.xlu0 %v1547
    %v1549 = vpop.xlane.xlu0 %1548
    %v1550 = vsel %vm1511, %v1530, 0.0
    %1551 = vadd.xlane.f32.xlu0 %v1550
    %v1552 = vpop.xlane.xlu0 %1551
    %v1553 = vsel %vm1511, %v1531, 0.0
    %1554 = vadd.xlane.f32.xlu0 %v1553
    %v1555 = vpop.xlane.xlu0 %1554
    %v1556 = vsel %vm1511, %v1532, 0.0
    %1557 = vadd.xlane.f32.xlu0 %v1556
    %v1558 = vpop.xlane.xlu0 %1557
    %v1559 = vsel %vm1511, %v1533, 0.0
    %1560 = vadd.xlane.f32.xlu0 %v1559
    %v1561 = vpop.xlane.xlu0 %1560
    %v1562 = vsel %vm1511, %v1534, 0.0
    %1563 = vadd.xlane.f32.xlu0 %v1562
    %v1564 = vpop.xlane.xlu0 %1563
    %v1565 = vsel %vm1511, %v1535, 0.0
    %1566 = vadd.xlane.f32.xlu0 %v1565
    %v1567 = vpop.xlane.xlu0 %1566
    %v1568 = vsel %vm1511, %v1536, 0.0
    %1569 = vadd.xlane.f32.xlu0 %v1568
    %v1570 = vpop.xlane.xlu0 %1569
    %v1571 = vsel %vm1511, %v1537, 0.0
    %1572 = vadd.xlane.f32.xlu0 %v1571
    %v1573 = vpop.xlane.xlu0 %1572
    %v1574 = vsel %vm1511, %v1538, 0.0
    %1575 = vadd.xlane.f32.xlu0 %v1574
    %v1576 = vpop.xlane.xlu0 %1575
    %v1577 = vsel %vm1511, %v1539, 0.0
    %1578 = vadd.xlane.f32.xlu0 %v1577
    %v1579 = vpop.xlane.xlu0 %1578
    %v1580 = vsel %vm1511, %v1540, 0.0
    %1581 = vadd.xlane.f32.xlu0 %v1580
    %v1582 = vpop.xlane.xlu0 %1581
    %v1583 = vsel %vm1511, %v1541, 0.0
    %1584 = vadd.xlane.f32.xlu0 %v1583
    %v1585 = vpop.xlane.xlu0 %1584
    %v1586 = vsel %vm1511, %v1542, 0.0
    %1587 = vadd.xlane.f32.xlu0 %v1586
    %v1588 = vpop.xlane.xlu0 %1587
    %v1589 = vsel %vm1511, %v1543, 0.0
    %1590 = vadd.xlane.f32.xlu0 %v1589
    %v1591 = vpop.xlane.xlu0 %1590
    %v1592 = vmul.f32 %v1546, 0.5
    %v1593 = vmul.f32 %v1549, 0.5
    %v1594 = vmul.f32 %v1552, 0.5
    %v1595 = vmul.f32 %v1555, 0.5
    %v1596 = vmul.f32 %v1558, 0.5
    %v1597 = vmul.f32 %v1561, 0.5
    %v1598 = vmul.f32 %v1564, 0.5
    %v1599 = vmul.f32 %v1567, 0.5
    %v1600 = vmul.f32 %v1570, 0.5
    %v1601 = vmul.f32 %v1573, 0.5
    %v1602 = vmul.f32 %v1576, 0.5
    %v1603 = vmul.f32 %v1579, 0.5
    %v1604 = vmul.f32 %v1582, 0.5
    %v1605 = vmul.f32 %v1585, 0.5
    %v1606 = vmul.f32 %v1588, 0.5
    %v1607 = vmul.f32 %v1591, 0.5
    %vm1608 = vcmask 7168
    %1609 = vst.msk [vmem:[%s8] sm:$0xff] %vm1608, %v1592
    %1610 = vst.msk [vmem:[%s8 + $0x8] sm:$0xff] %vm1608, %v1593
    %1611 = vst.msk [vmem:[%s8 + $0x10] sm:$0xff] %vm1608, %v1594
    %1612 = vst.msk [vmem:[%s8 + $0x18] sm:$0xff] %vm1608, %v1595
    %1613 = vst.msk [vmem:[%s8 + $0x20] sm:$0xff] %vm1608, %v1596
    %1614 = vst.msk [vmem:[%s8 + $0x28] sm:$0xff] %vm1608, %v1597
    %1615 = vst.msk [vmem:[%s8 + $0x30] sm:$0xff] %vm1608, %v1598
    %1616 = vst.msk [vmem:[%s8 + $0x38] sm:$0xff] %vm1608, %v1599
    %1617 = vst.msk [vmem:[%s8 + $0x40] sm:$0xff] %vm1608, %v1600
    %1618 = vst.msk [vmem:[%s8 + $0x48] sm:$0xff] %vm1608, %v1601
    %1619 = vst.msk [vmem:[%s8 + $0x50] sm:$0xff] %vm1608, %v1602
    %1620 = vst.msk [vmem:[%s8 + $0x58] sm:$0xff] %vm1608, %v1603
    %1621 = vst.msk [vmem:[%s8 + $0x60] sm:$0xff] %vm1608, %v1604
    %1622 = vst.msk [vmem:[%s8 + $0x68] sm:$0xff] %vm1608, %v1605
    %1623 = vst.msk [vmem:[%s8 + $0x70] sm:$0xff] %vm1608, %v1606
    %1624 = vst.msk [vmem:[%s8 + $0x78] sm:$0xff] %vm1608, %v1607
    // Predicated region
    $region34: #{tpu_custom_call.1} parent=1 // pred_check
      _
    $region35: #{tpu_custom_call.1} parent=1 // pred_check_branch
      %1626 = sbr.rel (0) target = $region37
    $region36: #{tpu_custom_call.1} parent=1 // pred_region
      _
    $region37: #{tpu_custom_call.1} parent=1 // pred_fallthru
      _
    // Predicated region
    $region38: #{tpu_custom_call.1} parent=1 // pred_check
      _
    $region39: #{tpu_custom_call.1} parent=1 // pred_check_branch
      %1628 = sbr.rel (0) target = $region41
    $region40: #{tpu_custom_call.1} parent=1 // pred_region
      _
    $region41: #{tpu_custom_call.1} parent=1 // pred_fallthru
      _
    // Predicated region
    $region42: #{tpu_custom_call.1} parent=1 // pred_check
      _
    $region43: #{tpu_custom_call.1} parent=1 // pred_check_branch
      %1630 = sbr.rel (0) target = $region45
    $region44: #{tpu_custom_call.1} parent=1 // pred_region
      _
    $region45: #{tpu_custom_call.1} parent=1 // pred_fallthru
      _
    // Predicated region
    $region46: #{tpu_custom_call.1} parent=1 // pred_check
      _
    $region47: #{tpu_custom_call.1} parent=1 // pred_check_branch
      %1632 = sbr.rel (0) target = $region49
    $region48: #{tpu_custom_call.1} parent=1 // pred_region
      _
    $region49: #{tpu_custom_call.1} parent=1 // pred_fallthru
      _
    %1633 = vsyncpa [#allocation3], 1

</llo_original>
